<compile_context>
chip_gen: v7x
topology: tpu7x:2x2x1
jax: 0.10.0
libtpu: 0.0.40
codegen_flags: <defaults>
</compile_context>

<pallas_src>
import math
import functools

import jax
import jax.numpy as jnp
from jax import lax
from jax.experimental import pallas as pl
from jax.experimental.pallas import tpu as pltpu


def _round_up(x, m):
    return ((x + m - 1) // m) * m


def _sigmoid(x):
    # sigmoid(x) == 0.5 * (tanh(x/2) + 1); tanh lowers to the EUP.
    return 0.5 * (jnp.tanh(0.5 * x) + 1.0)


# ----------------------------------------------------------------------------
# Pallas kernel: grid = (batch blocks, time chunks); time is the reduction axis.
# ----------------------------------------------------------------------------
def gru_kernel(blkmax_ref,                                   # SMEM (nb,) int32
               x_ref, lens_ref, w_ih_ref, b_ih_ref, w_hh_ref, b_hh_ref,
               w_out_ref, b_out_ref,                         # inputs
               out_ref,                                      # output
               xp_ref, h_ref,                                # VMEM scratch
               *, Tc, BB, Hp):
    i = pl.program_id(0)        # batch block
    tc = pl.program_id(1)       # time chunk (innermost / "arbitrary")

    # New batch block -> reset the persistent hidden-state carry.
    @pl.when(tc == 0)
    def _():
        h_ref[...] = jnp.zeros_like(h_ref)

    chunk_start = tc * Tc

    # Skip chunks entirely past this block's longest sequence (lengths sorted
    # descending per pack_padded_sequence, so padding-only chunks are common).
    @pl.when(chunk_start < blkmax_ref[i])
    def _():
        # Input projection for the whole chunk in ONE MXU matmul (M = Tc*BB).
        x = x_ref[0]                                          # (Tc*BB, D) bf16
        xp_ref[...] = (jnp.dot(x, w_ih_ref[...],
                               preferred_element_type=jnp.float32)
                       + b_ih_ref[...]).astype(jnp.bfloat16)  # (Tc*BB, 3Hp)

        lens = lens_ref[0]                                    # (BB, 1) int32
        w_hh = w_hh_ref[...]                                  # (Hp, 3Hp) bf16
        b_hh = b_hh_ref[...]                                  # (1, 3Hp) f32

        def step(t, h):
            # aligned dynamic sublane slice: t*BB is a multiple of 16 (bf16 tile)
            off = pl.multiple_of(t * BB, 16)
            xp_t = xp_ref[pl.ds(off, BB), :].astype(jnp.float32)   # (BB, 3Hp)
            hp = (jnp.dot(h.astype(w_hh.dtype), w_hh,
                          preferred_element_type=jnp.float32) + b_hh)
            # PyTorch GRU gate order [r | z | n]; b_hn stays inside the
            # r-product. Slices are lane-aligned since Hp % 128 == 0.
            r = _sigmoid(xp_t[:, 0 * Hp:1 * Hp] + hp[:, 0 * Hp:1 * Hp])
            z = _sigmoid(xp_t[:, 1 * Hp:2 * Hp] + hp[:, 1 * Hp:2 * Hp])
            n = jnp.tanh(xp_t[:, 2 * Hp:3 * Hp] + r * hp[:, 2 * Hp:3 * Hp])
            h_new = (1.0 - z) * n + z * h
            # packed-sequence semantics: freeze row once t >= its length.
            return jnp.where(chunk_start + t < lens, h_new, h)

        h_ref[...] = lax.fori_loop(0, Tc, step, h_ref[...],
                                   unroll=min(Tc, 8))

    # bio_scoring on the last valid hidden state only (single lane-dense store).
    @pl.when(tc == pl.num_programs(1) - 1)
    def _():
        out_ref[0] = (jnp.dot(h_ref[...].astype(w_out_ref.dtype),
                              w_out_ref[...],
                              preferred_element_type=jnp.float32)
                      + b_out_ref[...])


def bio_encoder_rnn(bio, bio_lengths, params):
    emb = params["embedding"]                        # (n_bios, D) f32
    w_ih, b_ih = params["w_ih"], params["b_ih"]      # (D, 3H) bf16 / (1, 3H) f32
    w_hh, b_hh = params["w_hh"], params["b_hh"]      # (H, 3H) bf16 / (1, 3H) f32
    w_out, b_out = params["w_out"], params["b_out"]  # (H, O) bf16 / (1, O) f32

    B, T = bio.shape
    D = emb.shape[1]
    H = w_hh.shape[0]
    O = w_out.shape[1]

    # ---- lane-aligned padded weight layouts (pad with zeros, once) ----------
    # Padded hidden lanes stay exactly 0: xp=hp=0 => n=0, z=0.5 => h stays 0,
    # and the zero-padded rows of w_out drop them from the output.
    Hp = _round_up(H, 128)        # each gate starts at a lane multiple of 128
    Op = _round_up(O, 128)        # lane-dense output store

    def pad_gates(w):
        parts = [w[..., k * H:(k + 1) * H] for k in range(3)]
        pads = [(0, 0)] * (w.ndim - 1) + [(0, Hp - H)]
        return jnp.concatenate([jnp.pad(p, pads) for p in parts], axis=-1)

    w_ih_p = pad_gates(w_ih)                                     # (D, 3Hp)
    b_ih_p = pad_gates(b_ih)                                     # (1, 3Hp)
    w_hh_p = pad_gates(jnp.pad(w_hh, ((0, Hp - H), (0, 0))))     # (Hp, 3Hp)
    b_hh_p = pad_gates(b_hh)                                     # (1, 3Hp)
    w_out_p = jnp.pad(w_out, ((0, Hp - H), (0, Op - O)))         # (Hp, Op)
    b_out_p = jnp.pad(b_out, ((0, 0), (0, Op - O)))              # (1, Op)

    # ---- batch blocking ------------------------------------------------------
    SUB = 16                      # bf16 sublane tile -> keeps xp slices aligned
    BB = min(_round_up(B, SUB), 128)
    if B > SUB:                   # prefer >=2 blocks so the "parallel" axis can
        BB = min(BB, _round_up((B + 1) // 2, SUB))   # shard over v7x's 2 TCs
    B_pad = _round_up(B, BB)
    nb = B_pad // BB
    pad_b = B_pad - B

    # ---- time chunking: bound VMEM independent of T --------------------------
    # per-timestep VMEM ~= BB * (2x-buffered bf16 x + bf16 xp) bytes
    bytes_per_t = BB * (2 * D * 2 + 3 * Hp * 2)
    Tc = max(1, min(T, (8 << 20) // max(bytes_per_t, 1)))
    T_pad = _round_up(T, Tc)
    n_tc = T_pad // Tc
    pad_t = T_pad - T

    # ---- embedding gather directly into the kernel layout --------------------
    # Rearranging the tiny int32 index array (instead of the (B,T,D) activation)
    # avoids an extra HBM pass: x is written exactly once, already t-major per
    # batch block with row order t*BB + b.
    idx = jnp.pad(bio, ((0, pad_b), (0, pad_t)))                 # (B_pad, T_pad)
    idx = idx.reshape(nb, BB, T_pad).transpose(0, 2, 1).reshape(nb, T_pad * BB)
    x = jnp.take(emb, idx, axis=0).astype(jnp.bfloat16)          # (nb, T_pad*BB, D)

    lens = jnp.pad(bio_lengths.astype(jnp.int32), (0, pad_b))    # pad rows: len 0
    lens_blk = lens.reshape(nb, BB, 1)
    blk_max = lens.reshape(nb, BB).max(axis=1).astype(jnp.int32)  # (nb,)

    kernel = functools.partial(gru_kernel, Tc=Tc, BB=BB, Hp=Hp)

    out = pl.pallas_call(
        kernel,
        out_shape=jax.ShapeDtypeStruct((nb, BB, Op), jnp.float32),
        grid_spec=pltpu.PrefetchScalarGridSpec(
            num_scalar_prefetch=1,                               # blk_max -> SMEM
            grid=(nb, n_tc),
            in_specs=[
                pl.BlockSpec((1, Tc * BB, D), lambda i, t, *_: (i, t, 0)),  # x
                pl.BlockSpec((1, BB, 1), lambda i, t, *_: (i, 0, 0)),       # lens
                pl.BlockSpec(w_ih_p.shape, lambda i, t, *_: (0, 0)),  # weights are
                pl.BlockSpec(b_ih_p.shape, lambda i, t, *_: (0, 0)),  # grid-constant
                pl.BlockSpec(w_hh_p.shape, lambda i, t, *_: (0, 0)),
                pl.BlockSpec(b_hh_p.shape, lambda i, t, *_: (0, 0)),
                pl.BlockSpec(w_out_p.shape, lambda i, t, *_: (0, 0)),
                pl.BlockSpec(b_out_p.shape, lambda i, t, *_: (0, 0)),
            ],
            out_specs=pl.BlockSpec((1, BB, Op), lambda i, t, *_: (i, 0, 0)),
            scratch_shapes=[
                pltpu.VMEM((Tc * BB, 3 * Hp), jnp.bfloat16),  # xp (bf16: half VMEM)
                pltpu.VMEM((BB, Hp), jnp.float32),            # persistent h carry
            ],
        ),
        compiler_params=pltpu.CompilerParams(
            dimension_semantics=("parallel", "arbitrary"),
            vmem_limit_bytes=32 * 1024 * 1024,
        ),
    )(blk_max, x, lens_blk, w_ih_p, b_ih_p, w_hh_p, b_hh_p, w_out_p, b_out_p)

    return out.reshape(B_pad, Op)[:B, :O]                        # (B, nb_fc_node)


# ----------------------------------------------------------------------------
# Pure-JAX reference (same numeric recipe: bf16 matmul inputs, f32 accumulate,
# bf16 xp round-trip, f32 gate math).
# ----------------------------------------------------------------------------
def reference(bio, bio_lengths, params):
    emb = params["embedding"]
    B, T = bio.shape
    H = params["w_hh"].shape[0]
    x = jnp.take(emb, bio, axis=0).astype(jnp.bfloat16)          # (B, T, D)

    xp = (jnp.dot(x.reshape(B * T, -1), params["w_ih"],
                  preferred_element_type=jnp.float32)
          + params["b_ih"]).astype(jnp.bfloat16).reshape(B, T, 3 * H)

    h = jnp.zeros((B, H), jnp.float32)
    for t in range(T):
        hp = (jnp.dot(h.astype(jnp.bfloat16), params["w_hh"],
                      preferred_element_type=jnp.float32) + params["b_hh"])
        xt = xp[:, t].astype(jnp.float32)
        r = _sigmoid(xt[:, :H] + hp[:, :H])
        z = _sigmoid(xt[:, H:2 * H] + hp[:, H:2 * H])
        n = jnp.tanh(xt[:, 2 * H:] + r * hp[:, 2 * H:])
        h_new = (1.0 - z) * n + z * h
        h = jnp.where((t < bio_lengths)[:, None], h_new, h)

    return (jnp.dot(h.astype(jnp.bfloat16), params["w_out"],
                    preferred_element_type=jnp.float32) + params["b_out"])


# ----------------------------------------------------------------------------
# Deterministic parameters + demo run.
# ----------------------------------------------------------------------------
def make_params(key, *, n_bios, bio_dim, bio_rnn, nb_fc_node):
    D, H, O = bio_dim, bio_rnn, nb_fc_node
    ks = jax.random.split(key, 7)
    f32, bf16 = jnp.float32, jnp.bfloat16
    s = 1.0 / math.sqrt(H)

    def uni(k, shape):
        return jax.random.uniform(k, shape, f32, -s, s)

    return {
        # nn.Embedding(n_bios, D) default init N(0,1)
        "embedding": jax.random.normal(ks[0], (n_bios, D), f32),
        # GRU weights stored transposed (in, 3H); gate order [r | z | n]
        # (i.e. w_ih = weight_ih_l0.T, etc.). bf16 for MXU inputs.
        "w_ih": uni(ks[1], (D, 3 * H)).astype(bf16),
        "w_hh": uni(ks[2], (H, 3 * H)).astype(bf16),
        "b_ih": uni(ks[3], (1, 3 * H)),
        "b_hh": uni(ks[4], (1, 3 * H)),
        # bio_scoring Linear(H, O), stored (in, out)
        "w_out": uni(ks[5], (H, O)).astype(bf16),
        "b_out": uni(ks[6], (1, O)),
    }


if __name__ == "__main__":
    d_args = dict(n_bios=10, bio_dim=32, bio_rnn=32, nb_fc_node=8)
    B, T = 2, 8

    key = jax.random.PRNGKey(0)
    kp, kb = jax.random.split(key)
    params = make_params(kp, **d_args)

    bio = jax.random.randint(kb, (B, T), 0, d_args["n_bios"], dtype=jnp.int32)
    # pack_padded_sequence(enforce_sorted=True) expects descending lengths
    bio_lengths = jnp.array([T, T - 3], dtype=jnp.int32)

    out = bio_encoder_rnn(bio, bio_lengths, params)
    out = jax.block_until_ready(out)
    assert out.shape == (B, d_args["nb_fc_node"]), out.shape

    ref = reference(bio, bio_lengths, params)
    assert jnp.allclose(out, ref, rtol=1e-3, atol=1e-3), (out, ref)

    print("KERNEL_OK")
</pallas_src>

<mosaic_0001>
module attributes {stable_mosaic.version = 11 : i64} {
  func.func @gru_kernel(%arg0: i32, %arg1: i32, %arg2: memref<1xi32, #tpu.memory_space<smem>>, %arg3: memref<1x128x32xbf16, #tpu.memory_space<vmem>>, %arg4: memref<1x16x1xi32, #tpu.memory_space<vmem>>, %arg5: memref<32x384xbf16, #tpu.memory_space<vmem>>, %arg6: memref<1x384xf32, #tpu.memory_space<vmem>>, %arg7: memref<128x384xbf16, #tpu.memory_space<vmem>>, %arg8: memref<1x384xf32, #tpu.memory_space<vmem>>, %arg9: memref<128x128xbf16, #tpu.memory_space<vmem>>, %arg10: memref<1x128xf32, #tpu.memory_space<vmem>>, %arg11: memref<1x16x128xf32, #tpu.memory_space<vmem>>, %arg12: memref<128x384xbf16, #tpu.memory_space<vmem>>, %arg13: memref<16x128xf32, #tpu.memory_space<vmem>>) attributes {dimension_semantics = [#tpu.dimension_semantics<parallel>, #tpu.dimension_semantics<arbitrary>], iteration_bounds = array<i64: 1, 1>, scalar_prefetch = 1 : i64, scratch_operands = 2 : i64, tpu.core_type = #tpu.core_type<tc>, window_params = [{transform_indices = @transform_0, window_bounds = array<i64: 1, 128, 32>}, {transform_indices = @transform_1, window_bounds = array<i64: 1, 16, 1>}, {pipeline_mode = #tpu.pipeline_mode<synchronous>, transform_indices = @transform_2, window_bounds = array<i64: 32, 384>}, {pipeline_mode = #tpu.pipeline_mode<synchronous>, transform_indices = @transform_3, window_bounds = array<i64: 1, 384>}, {pipeline_mode = #tpu.pipeline_mode<synchronous>, transform_indices = @transform_4, window_bounds = array<i64: 128, 384>}, {pipeline_mode = #tpu.pipeline_mode<synchronous>, transform_indices = @transform_5, window_bounds = array<i64: 1, 384>}, {pipeline_mode = #tpu.pipeline_mode<synchronous>, transform_indices = @transform_6, window_bounds = array<i64: 128, 128>}, {pipeline_mode = #tpu.pipeline_mode<synchronous>, transform_indices = @transform_7, window_bounds = array<i64: 1, 128>}, {transform_indices = @transform_8, window_bounds = array<i64: 1, 16, 128>}]} {
    %c0_i32 = arith.constant 0 : i32
    %0 = arith.cmpi eq, %arg1, %c0_i32 : i32
    %1 = arith.extui %0 : i1 to i32
    %c0_i32_0 = arith.constant 0 : i32
    %2 = arith.cmpi ne, %1, %c0_i32_0 : i32
    scf.if %2 {
      %cst = arith.constant 0.000000e+00 : f32
      %12 = vector.broadcast %cst : f32 to vector<16x128xf32>
      %c0 = arith.constant 0 : index
      %c0_4 = arith.constant 0 : index
      %13 = vector.load %arg13[%c0, %c0_4] : memref<16x128xf32, #tpu.memory_space<vmem>>, vector<16x128xf32>
      tpu.vector_store %arg13[%c0, %c0_4], %12 {strides = array<i32>} : memref<16x128xf32, #tpu.memory_space<vmem>>, vector<16x128xf32>,
    } else {
    }
    %c8_i32 = arith.constant 8 : i32
    %3 = arith.muli %arg1, %c8_i32 : i32
    %4 = arith.index_cast %arg0 : i32 to index
    %5 = memref.load %arg2[%4] : memref<1xi32, #tpu.memory_space<smem>>
    %6 = arith.cmpi slt, %3, %5 : i32
    %7 = arith.extui %6 : i1 to i32
    %c0_i32_1 = arith.constant 0 : i32
    %8 = arith.cmpi ne, %7, %c0_i32_1 : i32
    scf.if %8 {
      %c0 = arith.constant 0 : index
      %c0_4 = arith.constant 0 : index
      %c0_5 = arith.constant 0 : index
      %12 = vector.load %arg3[%c0, %c0_4, %c0_5] : memref<1x128x32xbf16, #tpu.memory_space<vmem>>, vector<1x128x32xbf16>
      %13 = vector.shape_cast %12 : vector<1x128x32xbf16> to vector<128x32xbf16>
      %c0_6 = arith.constant 0 : index
      %c0_7 = arith.constant 0 : index
      %14 = vector.load %arg5[%c0_6, %c0_7] : memref<32x384xbf16, #tpu.memory_space<vmem>>, vector<32x384xbf16>
      %cst = arith.constant dense<0.000000e+00> : vector<128x384xf32>
      %15 = tpu.matmul %13, %14, %cst {dimension_numbers = #tpu.dot_dimension_numbers<[1], [0], [0], [1], [0, 0, 1, 1], [], []>} : vector<128x32xbf16>, vector<32x384xbf16>, vector<128x384xf32> -> vector<128x384xf32>
      %c0_8 = arith.constant 0 : index
      %c0_9 = arith.constant 0 : index
      %16 = vector.load %arg6[%c0_8, %c0_9] : memref<1x384xf32, #tpu.memory_space<vmem>>, vector<1x384xf32>
      %17 = vector.broadcast %16 : vector<1x384xf32> to vector<128x384xf32>
      %18 = arith.addf %15, %17 : vector<128x384xf32>
      %19 = arith.truncf %18 : vector<128x384xf32> to vector<128x384xbf16>
      %c0_10 = arith.constant 0 : index
      %c0_11 = arith.constant 0 : index
      %20 = vector.load %arg12[%c0_10, %c0_11] : memref<128x384xbf16, #tpu.memory_space<vmem>>, vector<128x384xbf16>
      tpu.vector_store %arg12[%c0_10, %c0_11], %19 {strides = array<i32>} : memref<128x384xbf16, #tpu.memory_space<vmem>>, vector<128x384xbf16>,
      %c0_12 = arith.constant 0 : index
      %c0_13 = arith.constant 0 : index
      %c0_14 = arith.constant 0 : index
      %21 = vector.load %arg4[%c0_12, %c0_13, %c0_14] : memref<1x16x1xi32, #tpu.memory_space<vmem>>, vector<1x16x1xi32>
      %22 = vector.shape_cast %21 : vector<1x16x1xi32> to vector<16x1xi32>
      %c0_15 = arith.constant 0 : index
      %c0_16 = arith.constant 0 : index
      %23 = vector.load %arg7[%c0_15, %c0_16] : memref<128x384xbf16, #tpu.memory_space<vmem>>, vector<128x384xbf16>
      %c0_17 = arith.constant 0 : index
      %c0_18 = arith.constant 0 : index
      %24 = vector.load %arg8[%c0_17, %c0_18] : memref<1x384xf32, #tpu.memory_space<vmem>>, vector<1x384xf32>
      %c0_19 = arith.constant 0 : index
      %c0_20 = arith.constant 0 : index
      %25 = vector.load %arg13[%c0_19, %c0_20] : memref<16x128xf32, #tpu.memory_space<vmem>>, vector<16x128xf32>
      %c0_i32_21 = arith.constant 0 : i32
      %c16_i32 = arith.constant 16 : i32
      %26 = arith.muli %c0_i32_21, %c16_i32 : i32
      %27 = tpu.assume_multiple %26, 16 : i32
      %28 = arith.index_cast %27 : i32 to index
      %c0_22 = arith.constant 0 : index
      %29 = vector.load %arg12[%28, %c0_22] : memref<128x384xbf16, #tpu.memory_space<vmem>>, vector<16x384xbf16>
      %30 = arith.extf %29 : vector<16x384xbf16> to vector<16x384xf32>
      %31 = arith.truncf %25 : vector<16x128xf32> to vector<16x128xbf16>
      %cst_23 = arith.constant dense<0.000000e+00> : vector<16x384xf32>
      %32 = tpu.matmul %31, %23, %cst_23 {dimension_numbers = #tpu.dot_dimension_numbers<[1], [0], [0], [1], [0, 0, 1, 1], [], []>} : vector<16x128xbf16>, vector<128x384xbf16>, vector<16x384xf32> -> vector<16x384xf32>
      %33 = vector.broadcast %24 : vector<1x384xf32> to vector<16x384xf32>
      %34 = arith.addf %32, %33 : vector<16x384xf32>
      %35 = vector.extract_strided_slice %30 {offsets = [0, 0], sizes = [16, 128], strides = [1, 1]} : vector<16x384xf32> to vector<16x128xf32>
      %36 = vector.extract_strided_slice %34 {offsets = [0, 0], sizes = [16, 128], strides = [1, 1]} : vector<16x384xf32> to vector<16x128xf32>
      %37 = arith.addf %35, %36 : vector<16x128xf32>
      %cst_24 = arith.constant 5.000000e-01 : f32
      %38 = vector.broadcast %cst_24 : f32 to vector<16x128xf32>
      %39 = arith.mulf %38, %37 : vector<16x128xf32>
      %40 = math.tanh %39 : vector<16x128xf32>
      %cst_25 = arith.constant 1.000000e+00 : f32
      %41 = vector.broadcast %cst_25 : f32 to vector<16x128xf32>
      %42 = arith.addf %40, %41 : vector<16x128xf32>
      %cst_26 = arith.constant 5.000000e-01 : f32
      %43 = vector.broadcast %cst_26 : f32 to vector<16x128xf32>
      %44 = arith.mulf %43, %42 : vector<16x128xf32>
      %45 = vector.extract_strided_slice %30 {offsets = [0, 128], sizes = [16, 128], strides = [1, 1]} : vector<16x384xf32> to vector<16x128xf32>
      %46 = vector.extract_strided_slice %34 {offsets = [0, 128], sizes = [16, 128], strides = [1, 1]} : vector<16x384xf32> to vector<16x128xf32>
      %47 = arith.addf %45, %46 : vector<16x128xf32>
      %cst_27 = arith.constant 5.000000e-01 : f32
      %48 = vector.broadcast %cst_27 : f32 to vector<16x128xf32>
      %49 = arith.mulf %48, %47 : vector<16x128xf32>
      %50 = math.tanh %49 : vector<16x128xf32>
      %cst_28 = arith.constant 1.000000e+00 : f32
      %51 = vector.broadcast %cst_28 : f32 to vector<16x128xf32>
      %52 = arith.addf %50, %51 : vector<16x128xf32>
      %cst_29 = arith.constant 5.000000e-01 : f32
      %53 = vector.broadcast %cst_29 : f32 to vector<16x128xf32>
      %54 = arith.mulf %53, %52 : vector<16x128xf32>
      %55 = vector.extract_strided_slice %30 {offsets = [0, 256], sizes = [16, 128], strides = [1, 1]} : vector<16x384xf32> to vector<16x128xf32>
      %56 = vector.extract_strided_slice %34 {offsets = [0, 256], sizes = [16, 128], strides = [1, 1]} : vector<16x384xf32> to vector<16x128xf32>
      %57 = arith.mulf %44, %56 : vector<16x128xf32>
      %58 = arith.addf %55, %57 : vector<16x128xf32>
      %59 = math.tanh %58 : vector<16x128xf32>
      %cst_30 = arith.constant 1.000000e+00 : f32
      %60 = vector.broadcast %cst_30 : f32 to vector<16x128xf32>
      %61 = arith.subf %60, %54 : vector<16x128xf32>
      %62 = arith.mulf %61, %59 : vector<16x128xf32>
      %63 = arith.mulf %54, %25 : vector<16x128xf32>
      %64 = arith.addf %62, %63 : vector<16x128xf32>
      %65 = arith.addi %3, %c0_i32_21 : i32
      %66 = vector.broadcast %65 : i32 to vector<16x1xi32>
      %67 = arith.cmpi slt, %66, %22 : vector<16x1xi32>
      %68 = vector.shape_cast %67 : vector<16x1xi1> to vector<16x1xi1>
      %69 = vector.broadcast %68 : vector<16x1xi1> to vector<16x128xi1>
      %70 = arith.select %69, %64, %25 : vector<16x128xi1>, vector<16x128xf32>
      %c1_i32 = arith.constant 1 : i32
      %c16_i32_31 = arith.constant 16 : i32
      %71 = arith.muli %c1_i32, %c16_i32_31 : i32
      %72 = tpu.assume_multiple %71, 16 : i32
      %73 = arith.index_cast %72 : i32 to index
      %c0_32 = arith.constant 0 : index
      %74 = vector.load %arg12[%73, %c0_32] : memref<128x384xbf16, #tpu.memory_space<vmem>>, vector<16x384xbf16>
      %75 = arith.extf %74 : vector<16x384xbf16> to vector<16x384xf32>
      %76 = arith.truncf %70 : vector<16x128xf32> to vector<16x128xbf16>
      %cst_33 = arith.constant dense<0.000000e+00> : vector<16x384xf32>
      %77 = tpu.matmul %76, %23, %cst_33 {dimension_numbers = #tpu.dot_dimension_numbers<[1], [0], [0], [1], [0, 0, 1, 1], [], []>} : vector<16x128xbf16>, vector<128x384xbf16>, vector<16x384xf32> -> vector<16x384xf32>
      %78 = vector.broadcast %24 : vector<1x384xf32> to vector<16x384xf32>
      %79 = arith.addf %77, %78 : vector<16x384xf32>
      %80 = vector.extract_strided_slice %75 {offsets = [0, 0], sizes = [16, 128], strides = [1, 1]} : vector<16x384xf32> to vector<16x128xf32>
      %81 = vector.extract_strided_slice %79 {offsets = [0, 0], sizes = [16, 128], strides = [1, 1]} : vector<16x384xf32> to vector<16x128xf32>
      %82 = arith.addf %80, %81 : vector<16x128xf32>
      %cst_34 = arith.constant 5.000000e-01 : f32
      %83 = vector.broadcast %cst_34 : f32 to vector<16x128xf32>
      %84 = arith.mulf %83, %82 : vector<16x128xf32>
      %85 = math.tanh %84 : vector<16x128xf32>
      %cst_35 = arith.constant 1.000000e+00 : f32
      %86 = vector.broadcast %cst_35 : f32 to vector<16x128xf32>
      %87 = arith.addf %85, %86 : vector<16x128xf32>
      %cst_36 = arith.constant 5.000000e-01 : f32
      %88 = vector.broadcast %cst_36 : f32 to vector<16x128xf32>
      %89 = arith.mulf %88, %87 : vector<16x128xf32>
      %90 = vector.extract_strided_slice %75 {offsets = [0, 128], sizes = [16, 128], strides = [1, 1]} : vector<16x384xf32> to vector<16x128xf32>
      %91 = vector.extract_strided_slice %79 {offsets = [0, 128], sizes = [16, 128], strides = [1, 1]} : vector<16x384xf32> to vector<16x128xf32>
      %92 = arith.addf %90, %91 : vector<16x128xf32>
      %cst_37 = arith.constant 5.000000e-01 : f32
      %93 = vector.broadcast %cst_37 : f32 to vector<16x128xf32>
      %94 = arith.mulf %93, %92 : vector<16x128xf32>
      %95 = math.tanh %94 : vector<16x128xf32>
      %cst_38 = arith.constant 1.000000e+00 : f32
      %96 = vector.broadcast %cst_38 : f32 to vector<16x128xf32>
      %97 = arith.addf %95, %96 : vector<16x128xf32>
      %cst_39 = arith.constant 5.000000e-01 : f32
      %98 = vector.broadcast %cst_39 : f32 to vector<16x128xf32>
      %99 = arith.mulf %98, %97 : vector<16x128xf32>
      %100 = vector.extract_strided_slice %75 {offsets = [0, 256], sizes = [16, 128], strides = [1, 1]} : vector<16x384xf32> to vector<16x128xf32>
      %101 = vector.extract_strided_slice %79 {offsets = [0, 256], sizes = [16, 128], strides = [1, 1]} : vector<16x384xf32> to vector<16x128xf32>
      %102 = arith.mulf %89, %101 : vector<16x128xf32>
      %103 = arith.addf %100, %102 : vector<16x128xf32>
      %104 = math.tanh %103 : vector<16x128xf32>
      %cst_40 = arith.constant 1.000000e+00 : f32
      %105 = vector.broadcast %cst_40 : f32 to vector<16x128xf32>
      %106 = arith.subf %105, %99 : vector<16x128xf32>
      %107 = arith.mulf %106, %104 : vector<16x128xf32>
      %108 = arith.mulf %99, %70 : vector<16x128xf32>
      %109 = arith.addf %107, %108 : vector<16x128xf32>
      %110 = arith.addi %3, %c1_i32 : i32
      %111 = vector.broadcast %110 : i32 to vector<16x1xi32>
      %112 = arith.cmpi slt, %111, %22 : vector<16x1xi32>
      %113 = vector.shape_cast %112 : vector<16x1xi1> to vector<16x1xi1>
      %114 = vector.broadcast %113 : vector<16x1xi1> to vector<16x128xi1>
      %115 = arith.select %114, %109, %70 : vector<16x128xi1>, vector<16x128xf32>
      %c2_i32 = arith.constant 2 : i32
      %c16_i32_41 = arith.constant 16 : i32
      %116 = arith.muli %c2_i32, %c16_i32_41 : i32
      %117 = tpu.assume_multiple %116, 16 : i32
      %118 = arith.index_cast %117 : i32 to index
      %c0_42 = arith.constant 0 : index
      %119 = vector.load %arg12[%118, %c0_42] : memref<128x384xbf16, #tpu.memory_space<vmem>>, vector<16x384xbf16>
      %120 = arith.extf %119 : vector<16x384xbf16> to vector<16x384xf32>
      %121 = arith.truncf %115 : vector<16x128xf32> to vector<16x128xbf16>
      %cst_43 = arith.constant dense<0.000000e+00> : vector<16x384xf32>
      %122 = tpu.matmul %121, %23, %cst_43 {dimension_numbers = #tpu.dot_dimension_numbers<[1], [0], [0], [1], [0, 0, 1, 1], [], []>} : vector<16x128xbf16>, vector<128x384xbf16>, vector<16x384xf32> -> vector<16x384xf32>
      %123 = vector.broadcast %24 : vector<1x384xf32> to vector<16x384xf32>
      %124 = arith.addf %122, %123 : vector<16x384xf32>
      %125 = vector.extract_strided_slice %120 {offsets = [0, 0], sizes = [16, 128], strides = [1, 1]} : vector<16x384xf32> to vector<16x128xf32>
      %126 = vector.extract_strided_slice %124 {offsets = [0, 0], sizes = [16, 128], strides = [1, 1]} : vector<16x384xf32> to vector<16x128xf32>
      %127 = arith.addf %125, %126 : vector<16x128xf32>
      %cst_44 = arith.constant 5.000000e-01 : f32
      %128 = vector.broadcast %cst_44 : f32 to vector<16x128xf32>
      %129 = arith.mulf %128, %127 : vector<16x128xf32>
      %130 = math.tanh %129 : vector<16x128xf32>
      %cst_45 = arith.constant 1.000000e+00 : f32
      %131 = vector.broadcast %cst_45 : f32 to vector<16x128xf32>
      %132 = arith.addf %130, %131 : vector<16x128xf32>
      %cst_46 = arith.constant 5.000000e-01 : f32
      %133 = vector.broadcast %cst_46 : f32 to vector<16x128xf32>
      %134 = arith.mulf %133, %132 : vector<16x128xf32>
      %135 = vector.extract_strided_slice %120 {offsets = [0, 128], sizes = [16, 128], strides = [1, 1]} : vector<16x384xf32> to vector<16x128xf32>
      %136 = vector.extract_strided_slice %124 {offsets = [0, 128], sizes = [16, 128], strides = [1, 1]} : vector<16x384xf32> to vector<16x128xf32>
      %137 = arith.addf %135, %136 : vector<16x128xf32>
      %cst_47 = arith.constant 5.000000e-01 : f32
      %138 = vector.broadcast %cst_47 : f32 to vector<16x128xf32>
      %139 = arith.mulf %138, %137 : vector<16x128xf32>
      %140 = math.tanh %139 : vector<16x128xf32>
      %cst_48 = arith.constant 1.000000e+00 : f32
      %141 = vector.broadcast %cst_48 : f32 to vector<16x128xf32>
      %142 = arith.addf %140, %141 : vector<16x128xf32>
      %cst_49 = arith.constant 5.000000e-01 : f32
      %143 = vector.broadcast %cst_49 : f32 to vector<16x128xf32>
      %144 = arith.mulf %143, %142 : vector<16x128xf32>
      %145 = vector.extract_strided_slice %120 {offsets = [0, 256], sizes = [16, 128], strides = [1, 1]} : vector<16x384xf32> to vector<16x128xf32>
      %146 = vector.extract_strided_slice %124 {offsets = [0, 256], sizes = [16, 128], strides = [1, 1]} : vector<16x384xf32> to vector<16x128xf32>
      %147 = arith.mulf %134, %146 : vector<16x128xf32>
      %148 = arith.addf %145, %147 : vector<16x128xf32>
      %149 = math.tanh %148 : vector<16x128xf32>
      %cst_50 = arith.constant 1.000000e+00 : f32
      %150 = vector.broadcast %cst_50 : f32 to vector<16x128xf32>
      %151 = arith.subf %150, %144 : vector<16x128xf32>
      %152 = arith.mulf %151, %149 : vector<16x128xf32>
      %153 = arith.mulf %144, %115 : vector<16x128xf32>
      %154 = arith.addf %152, %153 : vector<16x128xf32>
      %155 = arith.addi %3, %c2_i32 : i32
      %156 = vector.broadcast %155 : i32 to vector<16x1xi32>
      %157 = arith.cmpi slt, %156, %22 : vector<16x1xi32>
      %158 = vector.shape_cast %157 : vector<16x1xi1> to vector<16x1xi1>
      %159 = vector.broadcast %158 : vector<16x1xi1> to vector<16x128xi1>
      %160 = arith.select %159, %154, %115 : vector<16x128xi1>, vector<16x128xf32>
      %c3_i32 = arith.constant 3 : i32
      %c16_i32_51 = arith.constant 16 : i32
      %161 = arith.muli %c3_i32, %c16_i32_51 : i32
      %162 = tpu.assume_multiple %161, 16 : i32
      %163 = arith.index_cast %162 : i32 to index
      %c0_52 = arith.constant 0 : index
      %164 = vector.load %arg12[%163, %c0_52] : memref<128x384xbf16, #tpu.memory_space<vmem>>, vector<16x384xbf16>
      %165 = arith.extf %164 : vector<16x384xbf16> to vector<16x384xf32>
      %166 = arith.truncf %160 : vector<16x128xf32> to vector<16x128xbf16>
      %cst_53 = arith.constant dense<0.000000e+00> : vector<16x384xf32>
      %167 = tpu.matmul %166, %23, %cst_53 {dimension_numbers = #tpu.dot_dimension_numbers<[1], [0], [0], [1], [0, 0, 1, 1], [], []>} : vector<16x128xbf16>, vector<128x384xbf16>, vector<16x384xf32> -> vector<16x384xf32>
      %168 = vector.broadcast %24 : vector<1x384xf32> to vector<16x384xf32>
      %169 = arith.addf %167, %168 : vector<16x384xf32>
      %170 = vector.extract_strided_slice %165 {offsets = [0, 0], sizes = [16, 128], strides = [1, 1]} : vector<16x384xf32> to vector<16x128xf32>
      %171 = vector.extract_strided_slice %169 {offsets = [0, 0], sizes = [16, 128], strides = [1, 1]} : vector<16x384xf32> to vector<16x128xf32>
      %172 = arith.addf %170, %171 : vector<16x128xf32>
      %cst_54 = arith.constant 5.000000e-01 : f32
      %173 = vector.broadcast %cst_54 : f32 to vector<16x128xf32>
      %174 = arith.mulf %173, %172 : vector<16x128xf32>
      %175 = math.tanh %174 : vector<16x128xf32>
      %cst_55 = arith.constant 1.000000e+00 : f32
      %176 = vector.broadcast %cst_55 : f32 to vector<16x128xf32>
      %177 = arith.addf %175, %176 : vector<16x128xf32>
      %cst_56 = arith.constant 5.000000e-01 : f32
      %178 = vector.broadcast %cst_56 : f32 to vector<16x128xf32>
      %179 = arith.mulf %178, %177 : vector<16x128xf32>
      %180 = vector.extract_strided_slice %165 {offsets = [0, 128], sizes = [16, 128], strides = [1, 1]} : vector<16x384xf32> to vector<16x128xf32>
      %181 = vector.extract_strided_slice %169 {offsets = [0, 128], sizes = [16, 128], strides = [1, 1]} : vector<16x384xf32> to vector<16x128xf32>
      %182 = arith.addf %180, %181 : vector<16x128xf32>
      %cst_57 = arith.constant 5.000000e-01 : f32
      %183 = vector.broadcast %cst_57 : f32 to vector<16x128xf32>
      %184 = arith.mulf %183, %182 : vector<16x128xf32>
      %185 = math.tanh %184 : vector<16x128xf32>
      %cst_58 = arith.constant 1.000000e+00 : f32
      %186 = vector.broadcast %cst_58 : f32 to vector<16x128xf32>
      %187 = arith.addf %185, %186 : vector<16x128xf32>
      %cst_59 = arith.constant 5.000000e-01 : f32
      %188 = vector.broadcast %cst_59 : f32 to vector<16x128xf32>
      %189 = arith.mulf %188, %187 : vector<16x128xf32>
      %190 = vector.extract_strided_slice %165 {offsets = [0, 256], sizes = [16, 128], strides = [1, 1]} : vector<16x384xf32> to vector<16x128xf32>
      %191 = vector.extract_strided_slice %169 {offsets = [0, 256], sizes = [16, 128], strides = [1, 1]} : vector<16x384xf32> to vector<16x128xf32>
      %192 = arith.mulf %179, %191 : vector<16x128xf32>
      %193 = arith.addf %190, %192 : vector<16x128xf32>
      %194 = math.tanh %193 : vector<16x128xf32>
      %cst_60 = arith.constant 1.000000e+00 : f32
      %195 = vector.broadcast %cst_60 : f32 to vector<16x128xf32>
      %196 = arith.subf %195, %189 : vector<16x128xf32>
      %197 = arith.mulf %196, %194 : vector<16x128xf32>
      %198 = arith.mulf %189, %160 : vector<16x128xf32>
      %199 = arith.addf %197, %198 : vector<16x128xf32>
      %200 = arith.addi %3, %c3_i32 : i32
      %201 = vector.broadcast %200 : i32 to vector<16x1xi32>
      %202 = arith.cmpi slt, %201, %22 : vector<16x1xi32>
      %203 = vector.shape_cast %202 : vector<16x1xi1> to vector<16x1xi1>
      %204 = vector.broadcast %203 : vector<16x1xi1> to vector<16x128xi1>
      %205 = arith.select %204, %199, %160 : vector<16x128xi1>, vector<16x128xf32>
      %c4_i32 = arith.constant 4 : i32
      %c16_i32_61 = arith.constant 16 : i32
      %206 = arith.muli %c4_i32, %c16_i32_61 : i32
      %207 = tpu.assume_multiple %206, 16 : i32
      %208 = arith.index_cast %207 : i32 to index
      %c0_62 = arith.constant 0 : index
      %209 = vector.load %arg12[%208, %c0_62] : memref<128x384xbf16, #tpu.memory_space<vmem>>, vector<16x384xbf16>
      %210 = arith.extf %209 : vector<16x384xbf16> to vector<16x384xf32>
      %211 = arith.truncf %205 : vector<16x128xf32> to vector<16x128xbf16>
      %cst_63 = arith.constant dense<0.000000e+00> : vector<16x384xf32>
      %212 = tpu.matmul %211, %23, %cst_63 {dimension_numbers = #tpu.dot_dimension_numbers<[1], [0], [0], [1], [0, 0, 1, 1], [], []>} : vector<16x128xbf16>, vector<128x384xbf16>, vector<16x384xf32> -> vector<16x384xf32>
      %213 = vector.broadcast %24 : vector<1x384xf32> to vector<16x384xf32>
      %214 = arith.addf %212, %213 : vector<16x384xf32>
      %215 = vector.extract_strided_slice %210 {offsets = [0, 0], sizes = [16, 128], strides = [1, 1]} : vector<16x384xf32> to vector<16x128xf32>
      %216 = vector.extract_strided_slice %214 {offsets = [0, 0], sizes = [16, 128], strides = [1, 1]} : vector<16x384xf32> to vector<16x128xf32>
      %217 = arith.addf %215, %216 : vector<16x128xf32>
      %cst_64 = arith.constant 5.000000e-01 : f32
      %218 = vector.broadcast %cst_64 : f32 to vector<16x128xf32>
      %219 = arith.mulf %218, %217 : vector<16x128xf32>
      %220 = math.tanh %219 : vector<16x128xf32>
      %cst_65 = arith.constant 1.000000e+00 : f32
      %221 = vector.broadcast %cst_65 : f32 to vector<16x128xf32>
      %222 = arith.addf %220, %221 : vector<16x128xf32>
      %cst_66 = arith.constant 5.000000e-01 : f32
      %223 = vector.broadcast %cst_66 : f32 to vector<16x128xf32>
      %224 = arith.mulf %223, %222 : vector<16x128xf32>
      %225 = vector.extract_strided_slice %210 {offsets = [0, 128], sizes = [16, 128], strides = [1, 1]} : vector<16x384xf32> to vector<16x128xf32>
      %226 = vector.extract_strided_slice %214 {offsets = [0, 128], sizes = [16, 128], strides = [1, 1]} : vector<16x384xf32> to vector<16x128xf32>
      %227 = arith.addf %225, %226 : vector<16x128xf32>
      %cst_67 = arith.constant 5.000000e-01 : f32
      %228 = vector.broadcast %cst_67 : f32 to vector<16x128xf32>
      %229 = arith.mulf %228, %227 : vector<16x128xf32>
      %230 = math.tanh %229 : vector<16x128xf32>
      %cst_68 = arith.constant 1.000000e+00 : f32
      %231 = vector.broadcast %cst_68 : f32 to vector<16x128xf32>
      %232 = arith.addf %230, %231 : vector<16x128xf32>
      %cst_69 = arith.constant 5.000000e-01 : f32
      %233 = vector.broadcast %cst_69 : f32 to vector<16x128xf32>
      %234 = arith.mulf %233, %232 : vector<16x128xf32>
      %235 = vector.extract_strided_slice %210 {offsets = [0, 256], sizes = [16, 128], strides = [1, 1]} : vector<16x384xf32> to vector<16x128xf32>
      %236 = vector.extract_strided_slice %214 {offsets = [0, 256], sizes = [16, 128], strides = [1, 1]} : vector<16x384xf32> to vector<16x128xf32>
      %237 = arith.mulf %224, %236 : vector<16x128xf32>
      %238 = arith.addf %235, %237 : vector<16x128xf32>
      %239 = math.tanh %238 : vector<16x128xf32>
      %cst_70 = arith.constant 1.000000e+00 : f32
      %240 = vector.broadcast %cst_70 : f32 to vector<16x128xf32>
      %241 = arith.subf %240, %234 : vector<16x128xf32>
      %242 = arith.mulf %241, %239 : vector<16x128xf32>
      %243 = arith.mulf %234, %205 : vector<16x128xf32>
      %244 = arith.addf %242, %243 : vector<16x128xf32>
      %245 = arith.addi %3, %c4_i32 : i32
      %246 = vector.broadcast %245 : i32 to vector<16x1xi32>
      %247 = arith.cmpi slt, %246, %22 : vector<16x1xi32>
      %248 = vector.shape_cast %247 : vector<16x1xi1> to vector<16x1xi1>
      %249 = vector.broadcast %248 : vector<16x1xi1> to vector<16x128xi1>
      %250 = arith.select %249, %244, %205 : vector<16x128xi1>, vector<16x128xf32>
      %c5_i32 = arith.constant 5 : i32
      %c16_i32_71 = arith.constant 16 : i32
      %251 = arith.muli %c5_i32, %c16_i32_71 : i32
      %252 = tpu.assume_multiple %251, 16 : i32
      %253 = arith.index_cast %252 : i32 to index
      %c0_72 = arith.constant 0 : index
      %254 = vector.load %arg12[%253, %c0_72] : memref<128x384xbf16, #tpu.memory_space<vmem>>, vector<16x384xbf16>
      %255 = arith.extf %254 : vector<16x384xbf16> to vector<16x384xf32>
      %256 = arith.truncf %250 : vector<16x128xf32> to vector<16x128xbf16>
      %cst_73 = arith.constant dense<0.000000e+00> : vector<16x384xf32>
      %257 = tpu.matmul %256, %23, %cst_73 {dimension_numbers = #tpu.dot_dimension_numbers<[1], [0], [0], [1], [0, 0, 1, 1], [], []>} : vector<16x128xbf16>, vector<128x384xbf16>, vector<16x384xf32> -> vector<16x384xf32>
      %258 = vector.broadcast %24 : vector<1x384xf32> to vector<16x384xf32>
      %259 = arith.addf %257, %258 : vector<16x384xf32>
      %260 = vector.extract_strided_slice %255 {offsets = [0, 0], sizes = [16, 128], strides = [1, 1]} : vector<16x384xf32> to vector<16x128xf32>
      %261 = vector.extract_strided_slice %259 {offsets = [0, 0], sizes = [16, 128], strides = [1, 1]} : vector<16x384xf32> to vector<16x128xf32>
      %262 = arith.addf %260, %261 : vector<16x128xf32>
      %cst_74 = arith.constant 5.000000e-01 : f32
      %263 = vector.broadcast %cst_74 : f32 to vector<16x128xf32>
      %264 = arith.mulf %263, %262 : vector<16x128xf32>
      %265 = math.tanh %264 : vector<16x128xf32>
      %cst_75 = arith.constant 1.000000e+00 : f32
      %266 = vector.broadcast %cst_75 : f32 to vector<16x128xf32>
      %267 = arith.addf %265, %266 : vector<16x128xf32>
      %cst_76 = arith.constant 5.000000e-01 : f32
      %268 = vector.broadcast %cst_76 : f32 to vector<16x128xf32>
      %269 = arith.mulf %268, %267 : vector<16x128xf32>
      %270 = vector.extract_strided_slice %255 {offsets = [0, 128], sizes = [16, 128], strides = [1, 1]} : vector<16x384xf32> to vector<16x128xf32>
      %271 = vector.extract_strided_slice %259 {offsets = [0, 128], sizes = [16, 128], strides = [1, 1]} : vector<16x384xf32> to vector<16x128xf32>
      %272 = arith.addf %270, %271 : vector<16x128xf32>
      %cst_77 = arith.constant 5.000000e-01 : f32
      %273 = vector.broadcast %cst_77 : f32 to vector<16x128xf32>
      %274 = arith.mulf %273, %272 : vector<16x128xf32>
      %275 = math.tanh %274 : vector<16x128xf32>
      %cst_78 = arith.constant 1.000000e+00 : f32
      %276 = vector.broadcast %cst_78 : f32 to vector<16x128xf32>
      %277 = arith.addf %275, %276 : vector<16x128xf32>
      %cst_79 = arith.constant 5.000000e-01 : f32
      %278 = vector.broadcast %cst_79 : f32 to vector<16x128xf32>
      %279 = arith.mulf %278, %277 : vector<16x128xf32>
      %280 = vector.extract_strided_slice %255 {offsets = [0, 256], sizes = [16, 128], strides = [1, 1]} : vector<16x384xf32> to vector<16x128xf32>
      %281 = vector.extract_strided_slice %259 {offsets = [0, 256], sizes = [16, 128], strides = [1, 1]} : vector<16x384xf32> to vector<16x128xf32>
      %282 = arith.mulf %269, %281 : vector<16x128xf32>
      %283 = arith.addf %280, %282 : vector<16x128xf32>
      %284 = math.tanh %283 : vector<16x128xf32>
      %cst_80 = arith.constant 1.000000e+00 : f32
      %285 = vector.broadcast %cst_80 : f32 to vector<16x128xf32>
      %286 = arith.subf %285, %279 : vector<16x128xf32>
      %287 = arith.mulf %286, %284 : vector<16x128xf32>
      %288 = arith.mulf %279, %250 : vector<16x128xf32>
      %289 = arith.addf %287, %288 : vector<16x128xf32>
      %290 = arith.addi %3, %c5_i32 : i32
      %291 = vector.broadcast %290 : i32 to vector<16x1xi32>
      %292 = arith.cmpi slt, %291, %22 : vector<16x1xi32>
      %293 = vector.shape_cast %292 : vector<16x1xi1> to vector<16x1xi1>
      %294 = vector.broadcast %293 : vector<16x1xi1> to vector<16x128xi1>
      %295 = arith.select %294, %289, %250 : vector<16x128xi1>, vector<16x128xf32>
      %c6_i32 = arith.constant 6 : i32
      %c16_i32_81 = arith.constant 16 : i32
      %296 = arith.muli %c6_i32, %c16_i32_81 : i32
      %297 = tpu.assume_multiple %296, 16 : i32
      %298 = arith.index_cast %297 : i32 to index
      %c0_82 = arith.constant 0 : index
      %299 = vector.load %arg12[%298, %c0_82] : memref<128x384xbf16, #tpu.memory_space<vmem>>, vector<16x384xbf16>
      %300 = arith.extf %299 : vector<16x384xbf16> to vector<16x384xf32>
      %301 = arith.truncf %295 : vector<16x128xf32> to vector<16x128xbf16>
      %cst_83 = arith.constant dense<0.000000e+00> : vector<16x384xf32>
      %302 = tpu.matmul %301, %23, %cst_83 {dimension_numbers = #tpu.dot_dimension_numbers<[1], [0], [0], [1], [0, 0, 1, 1], [], []>} : vector<16x128xbf16>, vector<128x384xbf16>, vector<16x384xf32> -> vector<16x384xf32>
      %303 = vector.broadcast %24 : vector<1x384xf32> to vector<16x384xf32>
      %304 = arith.addf %302, %303 : vector<16x384xf32>
      %305 = vector.extract_strided_slice %300 {offsets = [0, 0], sizes = [16, 128], strides = [1, 1]} : vector<16x384xf32> to vector<16x128xf32>
      %306 = vector.extract_strided_slice %304 {offsets = [0, 0], sizes = [16, 128], strides = [1, 1]} : vector<16x384xf32> to vector<16x128xf32>
      %307 = arith.addf %305, %306 : vector<16x128xf32>
      %cst_84 = arith.constant 5.000000e-01 : f32
      %308 = vector.broadcast %cst_84 : f32 to vector<16x128xf32>
      %309 = arith.mulf %308, %307 : vector<16x128xf32>
      %310 = math.tanh %309 : vector<16x128xf32>
      %cst_85 = arith.constant 1.000000e+00 : f32
      %311 = vector.broadcast %cst_85 : f32 to vector<16x128xf32>
      %312 = arith.addf %310, %311 : vector<16x128xf32>
      %cst_86 = arith.constant 5.000000e-01 : f32
      %313 = vector.broadcast %cst_86 : f32 to vector<16x128xf32>
      %314 = arith.mulf %313, %312 : vector<16x128xf32>
      %315 = vector.extract_strided_slice %300 {offsets = [0, 128], sizes = [16, 128], strides = [1, 1]} : vector<16x384xf32> to vector<16x128xf32>
      %316 = vector.extract_strided_slice %304 {offsets = [0, 128], sizes = [16, 128], strides = [1, 1]} : vector<16x384xf32> to vector<16x128xf32>
      %317 = arith.addf %315, %316 : vector<16x128xf32>
      %cst_87 = arith.constant 5.000000e-01 : f32
      %318 = vector.broadcast %cst_87 : f32 to vector<16x128xf32>
      %319 = arith.mulf %318, %317 : vector<16x128xf32>
      %320 = math.tanh %319 : vector<16x128xf32>
      %cst_88 = arith.constant 1.000000e+00 : f32
      %321 = vector.broadcast %cst_88 : f32 to vector<16x128xf32>
      %322 = arith.addf %320, %321 : vector<16x128xf32>
      %cst_89 = arith.constant 5.000000e-01 : f32
      %323 = vector.broadcast %cst_89 : f32 to vector<16x128xf32>
      %324 = arith.mulf %323, %322 : vector<16x128xf32>
      %325 = vector.extract_strided_slice %300 {offsets = [0, 256], sizes = [16, 128], strides = [1, 1]} : vector<16x384xf32> to vector<16x128xf32>
      %326 = vector.extract_strided_slice %304 {offsets = [0, 256], sizes = [16, 128], strides = [1, 1]} : vector<16x384xf32> to vector<16x128xf32>
      %327 = arith.mulf %314, %326 : vector<16x128xf32>
      %328 = arith.addf %325, %327 : vector<16x128xf32>
      %329 = math.tanh %328 : vector<16x128xf32>
      %cst_90 = arith.constant 1.000000e+00 : f32
      %330 = vector.broadcast %cst_90 : f32 to vector<16x128xf32>
      %331 = arith.subf %330, %324 : vector<16x128xf32>
      %332 = arith.mulf %331, %329 : vector<16x128xf32>
      %333 = arith.mulf %324, %295 : vector<16x128xf32>
      %334 = arith.addf %332, %333 : vector<16x128xf32>
      %335 = arith.addi %3, %c6_i32 : i32
      %336 = vector.broadcast %335 : i32 to vector<16x1xi32>
      %337 = arith.cmpi slt, %336, %22 : vector<16x1xi32>
      %338 = vector.shape_cast %337 : vector<16x1xi1> to vector<16x1xi1>
      %339 = vector.broadcast %338 : vector<16x1xi1> to vector<16x128xi1>
      %340 = arith.select %339, %334, %295 : vector<16x128xi1>, vector<16x128xf32>
      %c7_i32 = arith.constant 7 : i32
      %c16_i32_91 = arith.constant 16 : i32
      %341 = arith.muli %c7_i32, %c16_i32_91 : i32
      %342 = tpu.assume_multiple %341, 16 : i32
      %343 = arith.index_cast %342 : i32 to index
      %c0_92 = arith.constant 0 : index
      %344 = vector.load %arg12[%343, %c0_92] : memref<128x384xbf16, #tpu.memory_space<vmem>>, vector<16x384xbf16>
      %345 = arith.extf %344 : vector<16x384xbf16> to vector<16x384xf32>
      %346 = arith.truncf %340 : vector<16x128xf32> to vector<16x128xbf16>
      %cst_93 = arith.constant dense<0.000000e+00> : vector<16x384xf32>
      %347 = tpu.matmul %346, %23, %cst_93 {dimension_numbers = #tpu.dot_dimension_numbers<[1], [0], [0], [1], [0, 0, 1, 1], [], []>} : vector<16x128xbf16>, vector<128x384xbf16>, vector<16x384xf32> -> vector<16x384xf32>
      %348 = vector.broadcast %24 : vector<1x384xf32> to vector<16x384xf32>
      %349 = arith.addf %347, %348 : vector<16x384xf32>
      %350 = vector.extract_strided_slice %345 {offsets = [0, 0], sizes = [16, 128], strides = [1, 1]} : vector<16x384xf32> to vector<16x128xf32>
      %351 = vector.extract_strided_slice %349 {offsets = [0, 0], sizes = [16, 128], strides = [1, 1]} : vector<16x384xf32> to vector<16x128xf32>
      %352 = arith.addf %350, %351 : vector<16x128xf32>
      %cst_94 = arith.constant 5.000000e-01 : f32
      %353 = vector.broadcast %cst_94 : f32 to vector<16x128xf32>
      %354 = arith.mulf %353, %352 : vector<16x128xf32>
      %355 = math.tanh %354 : vector<16x128xf32>
      %cst_95 = arith.constant 1.000000e+00 : f32
      %356 = vector.broadcast %cst_95 : f32 to vector<16x128xf32>
      %357 = arith.addf %355, %356 : vector<16x128xf32>
      %cst_96 = arith.constant 5.000000e-01 : f32
      %358 = vector.broadcast %cst_96 : f32 to vector<16x128xf32>
      %359 = arith.mulf %358, %357 : vector<16x128xf32>
      %360 = vector.extract_strided_slice %345 {offsets = [0, 128], sizes = [16, 128], strides = [1, 1]} : vector<16x384xf32> to vector<16x128xf32>
      %361 = vector.extract_strided_slice %349 {offsets = [0, 128], sizes = [16, 128], strides = [1, 1]} : vector<16x384xf32> to vector<16x128xf32>
      %362 = arith.addf %360, %361 : vector<16x128xf32>
      %cst_97 = arith.constant 5.000000e-01 : f32
      %363 = vector.broadcast %cst_97 : f32 to vector<16x128xf32>
      %364 = arith.mulf %363, %362 : vector<16x128xf32>
      %365 = math.tanh %364 : vector<16x128xf32>
      %cst_98 = arith.constant 1.000000e+00 : f32
      %366 = vector.broadcast %cst_98 : f32 to vector<16x128xf32>
      %367 = arith.addf %365, %366 : vector<16x128xf32>
      %cst_99 = arith.constant 5.000000e-01 : f32
      %368 = vector.broadcast %cst_99 : f32 to vector<16x128xf32>
      %369 = arith.mulf %368, %367 : vector<16x128xf32>
      %370 = vector.extract_strided_slice %345 {offsets = [0, 256], sizes = [16, 128], strides = [1, 1]} : vector<16x384xf32> to vector<16x128xf32>
      %371 = vector.extract_strided_slice %349 {offsets = [0, 256], sizes = [16, 128], strides = [1, 1]} : vector<16x384xf32> to vector<16x128xf32>
      %372 = arith.mulf %359, %371 : vector<16x128xf32>
      %373 = arith.addf %370, %372 : vector<16x128xf32>
      %374 = math.tanh %373 : vector<16x128xf32>
      %cst_100 = arith.constant 1.000000e+00 : f32
      %375 = vector.broadcast %cst_100 : f32 to vector<16x128xf32>
      %376 = arith.subf %375, %369 : vector<16x128xf32>
      %377 = arith.mulf %376, %374 : vector<16x128xf32>
      %378 = arith.mulf %369, %340 : vector<16x128xf32>
      %379 = arith.addf %377, %378 : vector<16x128xf32>
      %380 = arith.addi %3, %c7_i32 : i32
      %381 = vector.broadcast %380 : i32 to vector<16x1xi32>
      %382 = arith.cmpi slt, %381, %22 : vector<16x1xi32>
      %383 = vector.shape_cast %382 : vector<16x1xi1> to vector<16x1xi1>
      %384 = vector.broadcast %383 : vector<16x1xi1> to vector<16x128xi1>
      %385 = arith.select %384, %379, %340 : vector<16x128xi1>, vector<16x128xf32>
      %c8_i32_101 = arith.constant 8 : i32
      %c0_102 = arith.constant 0 : index
      %c0_103 = arith.constant 0 : index
      %386 = vector.load %arg13[%c0_102, %c0_103] : memref<16x128xf32, #tpu.memory_space<vmem>>, vector<16x128xf32>
      tpu.vector_store %arg13[%c0_102, %c0_103], %385 {strides = array<i32>} : memref<16x128xf32, #tpu.memory_space<vmem>>, vector<16x128xf32>,
    } else {
    }
    %c0_i32_2 = arith.constant 0 : i32
    %9 = arith.cmpi eq, %arg1, %c0_i32_2 : i32
    %10 = arith.extui %9 : i1 to i32
    %c0_i32_3 = arith.constant 0 : i32
    %11 = arith.cmpi ne, %10, %c0_i32_3 : i32
    scf.if %11 {
      %c0 = arith.constant 0 : index
      %c0_4 = arith.constant 0 : index
      %12 = vector.load %arg13[%c0, %c0_4] : memref<16x128xf32, #tpu.memory_space<vmem>>, vector<16x128xf32>
      %13 = arith.truncf %12 : vector<16x128xf32> to vector<16x128xbf16>
      %c0_5 = arith.constant 0 : index
      %c0_6 = arith.constant 0 : index
      %14 = vector.load %arg9[%c0_5, %c0_6] : memref<128x128xbf16, #tpu.memory_space<vmem>>, vector<128x128xbf16>
      %cst = arith.constant dense<0.000000e+00> : vector<16x128xf32>
      %15 = tpu.matmul %13, %14, %cst {dimension_numbers = #tpu.dot_dimension_numbers<[1], [0], [0], [1], [0, 0, 1, 1], [], []>} : vector<16x128xbf16>, vector<128x128xbf16>, vector<16x128xf32> -> vector<16x128xf32>
      %c0_7 = arith.constant 0 : index
      %c0_8 = arith.constant 0 : index
      %16 = vector.load %arg10[%c0_7, %c0_8] : memref<1x128xf32, #tpu.memory_space<vmem>>, vector<1x128xf32>
      %17 = vector.broadcast %16 : vector<1x128xf32> to vector<16x128xf32>
      %18 = arith.addf %15, %17 : vector<16x128xf32>
      %c0_9 = arith.constant 0 : index
      %c0_10 = arith.constant 0 : index
      %c0_11 = arith.constant 0 : index
      %19 = vector.load %arg11[%c0_9, %c0_10, %c0_11] : memref<1x16x128xf32, #tpu.memory_space<vmem>>, vector<1x16x128xf32>
      %20 = vector.shape_cast %19 : vector<1x16x128xf32> to vector<16x128xf32>
      %21 = vector.shape_cast %18 : vector<16x128xf32> to vector<1x16x128xf32>
      tpu.vector_store %arg11[%c0_9, %c0_10, %c0_11], %21 {strides = array<i32>} : memref<1x16x128xf32, #tpu.memory_space<vmem>>, vector<1x16x128xf32>,
    } else {
    }
    return
  }
  func.func @transform_0(%arg0: i32, %arg1: i32, %arg2: memref<1xi32, #tpu.memory_space<smem>>) -> (i32, i32, i32) {
    %c0_i32 = arith.constant 0 : i32
    %c0_i32_0 = arith.constant 0 : i32
    return %arg0, %arg1, %c0_i32 : i32, i32, i32
  }
  func.func @transform_1(%arg0: i32, %arg1: i32, %arg2: memref<1xi32, #tpu.memory_space<smem>>) -> (i32, i32, i32) {
    %c0_i32 = arith.constant 0 : i32
    %c0_i32_0 = arith.constant 0 : i32
    %c0_i32_1 = arith.constant 0 : i32
    return %arg0, %c0_i32, %c0_i32_0 : i32, i32, i32
  }
  func.func @transform_2(%arg0: i32, %arg1: i32, %arg2: memref<1xi32, #tpu.memory_space<smem>>) -> (i32, i32) {
    %c0_i32 = arith.constant 0 : i32
    %c0_i32_0 = arith.constant 0 : i32
    %c0_i32_1 = arith.constant 0 : i32
    return %c0_i32, %c0_i32_0 : i32, i32
  }
  func.func @transform_3(%arg0: i32, %arg1: i32, %arg2: memref<1xi32, #tpu.memory_space<smem>>) -> (i32, i32) {
    %c0_i32 = arith.constant 0 : i32
    %c0_i32_0 = arith.constant 0 : i32
    %c0_i32_1 = arith.constant 0 : i32
    return %c0_i32, %c0_i32_0 : i32, i32
  }
  func.func @transform_4(%arg0: i32, %arg1: i32, %arg2: memref<1xi32, #tpu.memory_space<smem>>) -> (i32, i32) {
    %c0_i32 = arith.constant 0 : i32
    %c0_i32_0 = arith.constant 0 : i32
    %c0_i32_1 = arith.constant 0 : i32
    return %c0_i32, %c0_i32_0 : i32, i32
  }
  func.func @transform_5(%arg0: i32, %arg1: i32, %arg2: memref<1xi32, #tpu.memory_space<smem>>) -> (i32, i32) {
    %c0_i32 = arith.constant 0 : i32
    %c0_i32_0 = arith.constant 0 : i32
    %c0_i32_1 = arith.constant 0 : i32
    return %c0_i32, %c0_i32_0 : i32, i32
  }
  func.func @transform_6(%arg0: i32, %arg1: i32, %arg2: memref<1xi32, #tpu.memory_space<smem>>) -> (i32, i32) {
    %c0_i32 = arith.constant 0 : i32
    %c0_i32_0 = arith.constant 0 : i32
    %c0_i32_1 = arith.constant 0 : i32
    return %c0_i32, %c0_i32_0 : i32, i32
  }
  func.func @transform_7(%arg0: i32, %arg1: i32, %arg2: memref<1xi32, #tpu.memory_space<smem>>) -> (i32, i32) {
    %c0_i32 = arith.constant 0 : i32
    %c0_i32_0 = arith.constant 0 : i32
    %c0_i32_1 = arith.constant 0 : i32
    return %c0_i32, %c0_i32_0 : i32, i32
  }
  func.func @transform_8(%arg0: i32, %arg1: i32, %arg2: memref<1xi32, #tpu.memory_space<smem>>) -> (i32, i32, i32) {
    %c0_i32 = arith.constant 0 : i32
    %c0_i32_0 = arith.constant 0 : i32
    %c0_i32_1 = arith.constant 0 : i32
    return %arg0, %c0_i32, %c0_i32_0 : i32, i32, i32
  }
}

</mosaic_0001>

<llo_original>
// kernel: tpu_custom_call.1
$region0: #{tpu_custom_call.1}
  #allocation0 [shape = 'u32[]', space=smem, size = 0x4, offset = 0x4, fixed_abs, tag = 'smem constant byte address 0x4 - core index']
  #allocation1 [shape = 'u32[144,128]{1,0:T(1,128)}', space=vmem, size = 0x12000, scoped, tag = 'internal scratch']
  #allocation2 [shape = 'bf16[128,384]{1,0:T(16,128)(2,1)}', space=vmem, size = 0x18000, scoped, tag = 'scratch operand']
  #allocation3 [shape = 'f32[16,128]{1,0:T(8,128)}', space=vmem, size = 0x2000, scoped, tag = 'scratch operand']
  #allocation4 [shape = 's32[1]{0}', space=sflag, size = 0x4, scoped, tag = 'scoped memory for tpu_custom_call.1']
  #allocation5 [shape = 's32[1]{0:T(128)S(6)}', space=smem, size = 0x200, scoped, tag = 'prefetched SMEM operand 0']
  %s0 = inlined_call_operand.<no memory space> [shape: s32[1], index: 0, kind: input, shape index: {}]
  %s1 = inlined_call_operand.vmem [shape: bf16[1,128,32], index: 1, kind: input, shape index: {}]
  %s2 = inlined_call_operand.vmem [shape: s32[1,16,1], index: 2, kind: input, shape index: {}]
  %s3 = inlined_call_operand.vmem [shape: bf16[32,384], index: 3, kind: input, shape index: {}]
  %s4 = inlined_call_operand.vmem [shape: f32[1,384], index: 4, kind: input, shape index: {}]
  %s5 = inlined_call_operand.hbm [shape: bf16[128,384], index: 5, kind: input, shape index: {}]
  %s6 = inlined_call_operand.vmem [shape: f32[1,384], index: 6, kind: input, shape index: {}]
  %s7 = inlined_call_operand.vmem [shape: bf16[128,128], index: 7, kind: input, shape index: {}]
  %s8 = inlined_call_operand.vmem [shape: f32[1,128], index: 8, kind: input, shape index: {}]
  %s9 = inlined_call_operand.hbm [shape: f32[1,16,128], index: 9, kind: output, shape index: {}]
  %s10 = sld [smem:[#allocation0]]
  $region58: #{tpu_custom_call.1} parent=0
    _
  %s12 = ssub.s32 1, %s10
  %s13 = scalar_select 0, %s12, %s10
  %14 = sst [smem:[#allocation5]] %s0
  $region1: #{tpu_custom_call.1} parent=0
    #allocation6 [shape = 'u8[98304]{0}', space=vmem, size = 0x18000, scoped, tag = 'input window, operand 5, single buffered']
    #allocation7 [shape = 's32[1]{0}', space=sflag, size = 0x4, scoped, tag = 'scoped memory for tpu_custom_call.1']
    #allocation8 [shape = 's32[1]{0}', space=sflag, size = 0x4, scoped, tag = 'scoped memory for tpu_custom_call.1']
    #allocation9 [shape = 'u8[8192]{0}', space=vmem, size = 0x2000, scoped, tag = 'output window, operand 0, single buffered']
    %15 = vsyncpa [#allocation7], 0
    %16 = vsyncpa [#allocation8], 0
    // Predicated region
    $region2: #{tpu_custom_call.1} parent=1 // pred_check
      _
    $region3: #{tpu_custom_call.1} parent=1 // pred_check_branch
      %18 = sbr.rel (0) target = $region5
    $region4: #{tpu_custom_call.1} parent=1 // pred_region
      _
    $region5: #{tpu_custom_call.1} parent=1 // pred_fallthru
      _
    // Predicated region
    $region6: #{tpu_custom_call.1} parent=1 // pred_check
      _
    $region7: #{tpu_custom_call.1} parent=1 // pred_check_branch
      %20 = sbr.rel (0) target = $region9
    $region8: #{tpu_custom_call.1} parent=1 // pred_region
      _
    $region9: #{tpu_custom_call.1} parent=1 // pred_fallthru
      _
    // Predicated region
    $region10: #{tpu_custom_call.1} parent=1 // pred_check
      _
    $region11: #{tpu_custom_call.1} parent=1 // pred_check_branch
      %22 = sbr.rel (0) target = $region13
    $region12: #{tpu_custom_call.1} parent=1 // pred_region
      _
    $region13: #{tpu_custom_call.1} parent=1 // pred_fallthru
      _
    // Predicated region
    $region14: #{tpu_custom_call.1} parent=1 // pred_check
      _
    $region15: #{tpu_custom_call.1} parent=1 // pred_check_branch
      %24 = sbr.rel (0) target = $region17
    $region16: #{tpu_custom_call.1} parent=1 // pred_region
      _
    $region17: #{tpu_custom_call.1} parent=1 // pred_fallthru
      _
    // Predicated region
    $region18: #{tpu_custom_call.1} parent=1 // pred_check
      _
    $region19: #{tpu_custom_call.1} parent=1 // pred_check_branch
      %26 = sbr.rel (0) target = $region21
    $region20: #{tpu_custom_call.1} parent=1 // pred_region
      %s28 = ssub.s32 3072, 3072
      %29 = vsyncadd [#allocation7], %s28
      %s30 = sshll.u32 [#allocation6], 4
      %s31 = int_to_ptr.vmem [resolvable:$true] %s30
      %36 = dma.hbm_to_vmem [thread:$0]  %s5, 3072, %s31, [#allocation7], 192, 192, 12
    $region21: #{tpu_custom_call.1} parent=1 // pred_fallthru
      _
    // Predicated region
    $region22: #{tpu_custom_call.1} parent=1 // pred_check
      _
    $region23: #{tpu_custom_call.1} parent=1 // pred_check_branch
      %38 = sbr.rel (0) target = $region25
    $region24: #{tpu_custom_call.1} parent=1 // pred_region
      _
    $region25: #{tpu_custom_call.1} parent=1 // pred_fallthru
      _
    // Predicated region
    $region26: #{tpu_custom_call.1} parent=1 // pred_check
      _
    $region27: #{tpu_custom_call.1} parent=1 // pred_check_branch
      %40 = sbr.rel (0) target = $region29
    $region28: #{tpu_custom_call.1} parent=1 // pred_region
      _
    $region29: #{tpu_custom_call.1} parent=1 // pred_fallthru
      _
    // Predicated region
    $region30: #{tpu_custom_call.1} parent=1 // pred_check
      _
    $region31: #{tpu_custom_call.1} parent=1 // pred_check_branch
      %42 = sbr.rel (0) target = $region33
    $region32: #{tpu_custom_call.1} parent=1 // pred_region
      _
    $region33: #{tpu_custom_call.1} parent=1 // pred_fallthru
      _
    // Predicated region
    $region34: #{tpu_custom_call.1} parent=1 // pred_check
      _
    $region35: #{tpu_custom_call.1} parent=1 // pred_check_branch
      %44 = sbr.rel (0) target = $region37
    $region36: #{tpu_custom_call.1} parent=1 // pred_region
      %45 = dma.done [#allocation7], 3072
    $region37: #{tpu_custom_call.1} parent=1 // pred_fallthru
      _
    %p47 = scmp.eq.s32.totalorder 0, 0
    // Predicated region
    $region38: #{tpu_custom_call.1} parent=1 // pred_check
      %p48 = pneg %p47
    $region39: #{tpu_custom_call.1} parent=1 // pred_check_branch
      %50 = sbr.rel (%p48) target = $region41
    $region40: #{tpu_custom_call.1} parent=1 // pred_region
      %51 = vst [vmem:[#allocation3] sm:$0xff] 0.0
      %52 = vst [vmem:[#allocation3 + $0x8] sm:$0xff] 0.0
    $region41: #{tpu_custom_call.1} parent=1 // pred_fallthru
      _
    %s53 = smul.u32 0, 8
    %s54 = sld [smem:[#allocation5]]
    %p55 = scmp.lt.s32.totalorder %s53, %s54
    // Predicated region
    $region42: #{tpu_custom_call.1} parent=1 // pred_check
      %p56 = pneg %p55
    $region43: #{tpu_custom_call.1} parent=1 // pred_check_branch
      %58 = sbr.rel (%p56) target = $region45
    $region44: #{tpu_custom_call.1} parent=1 // pred_region
      %v59 = vld [vmem:[%s1] sm:$0xf]
      %v60 = vld [vmem:[%s1 + $0x4] sm:$0xf]
      %v61 = vld [vmem:[%s1 + $0x8] sm:$0xf]
      %v62 = vld [vmem:[%s1 + $0xc] sm:$0xf]
      %v63 = vld [vmem:[%s1 + $0x10] sm:$0xf]
      %v64 = vld [vmem:[%s1 + $0x14] sm:$0xf]
      %v65 = vld [vmem:[%s1 + $0x18] sm:$0xf]
      %v66 = vld [vmem:[%s1 + $0x1c] sm:$0xf]
      %v67 = vld [vmem:[%s1 + $0x20] sm:$0xf]
      %v68 = vld [vmem:[%s1 + $0x24] sm:$0xf]
      %v69 = vld [vmem:[%s1 + $0x28] sm:$0xf]
      %v70 = vld [vmem:[%s1 + $0x2c] sm:$0xf]
      %v71 = vld [vmem:[%s1 + $0x30] sm:$0xf]
      %v72 = vld [vmem:[%s1 + $0x34] sm:$0xf]
      %v73 = vld [vmem:[%s1 + $0x38] sm:$0xf]
      %v74 = vld [vmem:[%s1 + $0x3c] sm:$0xf]
      %v75 = vld [vmem:[%s3] sm:$0xff]
      %v76 = vld [vmem:[%s3 + $0x8] sm:$0xf]
      %v77 = vld [vmem:[%s3 + $0xc] sm:$0xff]
      %v78 = vld [vmem:[%s3 + $0x14] sm:$0xf]
      %v79 = vld [vmem:[%s3 + $0x18] sm:$0xff]
      %v80 = vld [vmem:[%s3 + $0x20] sm:$0xf]
      %v81 = vld [vmem:[%s3 + $0x24] sm:$0xff]
      %v82 = vld [vmem:[%s3 + $0x2c] sm:$0xf]
      %v83 = vld [vmem:[%s4] sm:$0x7]
      %v85 = vlaneseq
      %v86 = vshrl.u32 %v85, 7
      %v87 = vsub.s32 0, %v86
      %v88 = vrot.slane %v83, %v87
      %v89 = vlaneseq
      %v90 = vshrl.u32 %v89, 7
      %v91 = vsub.s32 1, %v90
      %v92 = vrot.slane %v83, %v91
      %v93 = vlaneseq
      %v94 = vshrl.u32 %v93, 7
      %v95 = vsub.s32 2, %v94
      %v96 = vrot.slane %v83, %v95
      %v116 = vunpack.c.l.b16 %v59
      %v117 = vunpack.c.l.b16 %v60
      %v118 = vunpack.c.l.b16 %v61
      %v119 = vunpack.c.l.b16 %v62
      %v120 = vunpack.c.l.b16 %v63
      %v121 = vunpack.c.l.b16 %v64
      %v122 = vunpack.c.l.b16 %v65
      %v123 = vunpack.c.l.b16 %v66
      %v124 = vunpack.c.l.b16 %v67
      %v125 = vunpack.c.l.b16 %v68
      %v126 = vunpack.c.l.b16 %v69
      %v127 = vunpack.c.l.b16 %v70
      %v128 = vunpack.c.l.b16 %v71
      %v129 = vunpack.c.l.b16 %v72
      %v130 = vunpack.c.l.b16 %v73
      %v131 = vunpack.c.l.b16 %v74
      %v132 = vpack.c.b16 %v117, %v116
      %v133 = vpack.c.b16 %v119, %v118
      %v134 = vpack.c.b16 %v121, %v120
      %v135 = vpack.c.b16 %v123, %v122
      %v136 = vpack.c.b16 %v125, %v124
      %v137 = vpack.c.b16 %v127, %v126
      %v138 = vpack.c.b16 %v129, %v128
      %v139 = vpack.c.b16 %v131, %v130
      %v148 = vunpack.c.l.b16 %v75
      %v149 = vunpack.c.h.b16 %v75
      %v150 = vunpack.c.l.b16 %v76
      %v151 = vunpack.c.l.b16 %v77
      %v152 = vunpack.c.h.b16 %v77
      %v153 = vunpack.c.l.b16 %v78
      %v154 = vunpack.c.l.b16 %v79
      %v155 = vunpack.c.h.b16 %v79
      %v156 = vunpack.c.l.b16 %v80
      %v157 = vunpack.c.l.b16 %v81
      %v158 = vunpack.c.h.b16 %v81
      %v159 = vunpack.c.l.b16 %v82
      %v160 = vpack.c.b16 %v151, %v148
      %v161 = vpack.c.b16 %v152, %v149
      %v162 = vpack.c.b16 %v153, %v150
      %v163 = vpack.c.b16 %v157, %v154
      %v164 = vpack.c.b16 %v158, %v155
      %v165 = vpack.c.b16 %v159, %v156
      %vm172 = vcmask 261120
      %v174 = vsel %vm172, %v132, 0
      %v177 = vsel %vm172, %v133, 0
      %v180 = vsel %vm172, %v134, 0
      %v183 = vsel %vm172, %v135, 0
      %v186 = vsel %vm172, %v136, 0
      %v189 = vsel %vm172, %v137, 0
      %v192 = vsel %vm172, %v138, 0
      %v195 = vsel %vm172, %v139, 0
      %197 = vmatprep.subr.bf16.mxu0 %v161
      %198 = vmatpush1.bf16.msra.mxu0 %v160
      %199 = vmatprep.subr.bf16.mxu0 %v164
      %200 = vmatpush1.bf16.msra.mxu0 %v163
      %201 = vmatprep.subr.bf16.mxu0 0
      %202 = vmatpush1.bf16.msra.mxu0 0
      %203 = vmatprep.subr.bf16.mxu0 0
      %204 = vmatpush1.bf16.msra.mxu0 0
      %205 = vmatprep.subr.bf16.mxu0 0
      %206 = vmatpush1.bf16.msra.mxu0 0
      %207 = vmatprep.subr.bf16.mxu0 0
      %208 = vmatpush1.bf16.msra.mxu0 0
      %209 = vmatprep.subr.bf16.mxu0 0
      %210 = vmatpush1.bf16.msra.mxu0 0
      %211 = vmatprep.subr.bf16.mxu0 0
      %212 = vmatpush1.bf16.msra.mxu0 0
      %213 = vmatprep.subr.bf16.mxu0 0
      %214 = vmatpush1.bf16.msra.mxu0 0
      %215 = vmatprep.subr.bf16.mxu0 0
      %216 = vmatpush1.bf16.msra.mxu0 0
      %217 = vmatprep.subr.bf16.mxu0 0
      %218 = vmatpush1.bf16.msra.mxu0 0
      %219 = vmatprep.subr.bf16.mxu0 0
      %220 = vmatpush1.bf16.msra.mxu0 0
      %221 = vmatprep.subr.bf16.mxu0 0
      %222 = vmatpush1.bf16.msra.mxu0 0
      %223 = vmatprep.subr.bf16.mxu0 0
      %224 = vmatpush1.bf16.msra.mxu0 0
      %225 = vmatprep.subr.bf16.mxu0 0
      %226 = vmatpush1.bf16.msra.mxu0 0
      %227 = vmatprep.subr.bf16.mxu0 0
      %228 = vmatpush1.bf16.msra.mxu0 0
      %229 = vmatprep.mubr.bf16.mxu0 0
      %230 = vmatmul.mubr.bf16.gmra.mrb[0].mxu0 %v174
      %v231 = vpop.f32.mrb[0].mxu0
      %v232 = vadd.f32 %v88, %v231
      %v233 = vpop.f32.mrb[0].mxu0
      %v234 = vadd.f32 %v92, %v233
      %v235 = vpop.f32.mrb[0].mxu0
      %v236 = vadd.f32 %v88, %v235
      %v237 = vpop.f32.mrb[0].mxu0
      %v238 = vadd.f32 %v92, %v237
      %239 = vmatprep.mubr.bf16.mxu0 0
      %240 = vmatmul.mubr.bf16.gmra.mrb[0].mxu0 %v177
      %v241 = vpop.f32.mrb[0].mxu0
      %v242 = vadd.f32 %v88, %v241
      %v243 = vpop.f32.mrb[0].mxu0
      %v244 = vadd.f32 %v92, %v243
      %v245 = vpop.f32.mrb[0].mxu0
      %v246 = vadd.f32 %v88, %v245
      %v247 = vpop.f32.mrb[0].mxu0
      %v248 = vadd.f32 %v92, %v247
      %249 = vmatprep.mubr.bf16.mxu0 0
      %250 = vmatmul.mubr.bf16.gmra.mrb[0].mxu0 %v180
      %v251 = vpop.f32.mrb[0].mxu0
      %v252 = vadd.f32 %v88, %v251
      %v253 = vpop.f32.mrb[0].mxu0
      %v254 = vadd.f32 %v92, %v253
      %v255 = vpop.f32.mrb[0].mxu0
      %v256 = vadd.f32 %v88, %v255
      %v257 = vpop.f32.mrb[0].mxu0
      %v258 = vadd.f32 %v92, %v257
      %259 = vmatprep.mubr.bf16.mxu0 0
      %260 = vmatmul.mubr.bf16.gmra.mrb[0].mxu0 %v183
      %v261 = vpop.f32.mrb[0].mxu0
      %v262 = vadd.f32 %v88, %v261
      %v263 = vpop.f32.mrb[0].mxu0
      %v264 = vadd.f32 %v92, %v263
      %v265 = vpop.f32.mrb[0].mxu0
      %v266 = vadd.f32 %v88, %v265
      %v267 = vpop.f32.mrb[0].mxu0
      %v268 = vadd.f32 %v92, %v267
      %269 = vmatprep.mubr.bf16.mxu0 0
      %270 = vmatmul.mubr.bf16.gmra.mrb[0].mxu0 %v186
      %v271 = vpop.f32.mrb[0].mxu0
      %v272 = vadd.f32 %v88, %v271
      %v273 = vpop.f32.mrb[0].mxu0
      %v274 = vadd.f32 %v92, %v273
      %v275 = vpop.f32.mrb[0].mxu0
      %v276 = vadd.f32 %v88, %v275
      %v277 = vpop.f32.mrb[0].mxu0
      %v278 = vadd.f32 %v92, %v277
      %279 = vmatprep.mubr.bf16.mxu0 0
      %280 = vmatmul.mubr.bf16.gmra.mrb[0].mxu0 %v189
      %v281 = vpop.f32.mrb[0].mxu0
      %v282 = vadd.f32 %v88, %v281
      %v283 = vpop.f32.mrb[0].mxu0
      %v284 = vadd.f32 %v92, %v283
      %v285 = vpop.f32.mrb[0].mxu0
      %v286 = vadd.f32 %v88, %v285
      %v287 = vpop.f32.mrb[0].mxu0
      %v288 = vadd.f32 %v92, %v287
      %289 = vmatprep.mubr.bf16.mxu0 0
      %290 = vmatmul.mubr.bf16.gmra.mrb[0].mxu0 %v192
      %v291 = vpop.f32.mrb[0].mxu0
      %v292 = vadd.f32 %v88, %v291
      %v293 = vpop.f32.mrb[0].mxu0
      %v294 = vadd.f32 %v92, %v293
      %v295 = vpop.f32.mrb[0].mxu0
      %v296 = vadd.f32 %v88, %v295
      %v297 = vpop.f32.mrb[0].mxu0
      %v298 = vadd.f32 %v92, %v297
      %299 = vmatprep.mubr.bf16.mxu0 0
      %300 = vmatmul.mubr.bf16.gmra.mrb[0].mxu0 %v195
      %v301 = vpop.f32.mrb[0].mxu0
      %v302 = vadd.f32 %v88, %v301
      %v303 = vpop.f32.mrb[0].mxu0
      %v304 = vadd.f32 %v92, %v303
      %v305 = vpop.f32.mrb[0].mxu0
      %v306 = vadd.f32 %v88, %v305
      %v307 = vpop.f32.mrb[0].mxu0
      %v308 = vadd.f32 %v92, %v307
      %309 = vdwg.mxu0
      %310 = vmatprep.subr.bf16.mxu0 0
      %311 = vmatpush1.bf16.msra.mxu0 %v162
      %312 = vmatprep.subr.bf16.mxu0 0
      %313 = vmatpush1.bf16.msra.mxu0 %v165
      %314 = vmatprep.subr.bf16.mxu0 0
      %315 = vmatpush1.bf16.msra.mxu0 0
      %316 = vmatprep.subr.bf16.mxu0 0
      %317 = vmatpush1.bf16.msra.mxu0 0
      %318 = vmatprep.subr.bf16.mxu0 0
      %319 = vmatpush1.bf16.msra.mxu0 0
      %320 = vmatprep.subr.bf16.mxu0 0
      %321 = vmatpush1.bf16.msra.mxu0 0
      %322 = vmatprep.subr.bf16.mxu0 0
      %323 = vmatpush1.bf16.msra.mxu0 0
      %324 = vmatprep.subr.bf16.mxu0 0
      %325 = vmatpush1.bf16.msra.mxu0 0
      %326 = vmatprep.subr.bf16.mxu0 0
      %327 = vmatpush1.bf16.msra.mxu0 0
      %328 = vmatprep.subr.bf16.mxu0 0
      %329 = vmatpush1.bf16.msra.mxu0 0
      %330 = vmatprep.subr.bf16.mxu0 0
      %331 = vmatpush1.bf16.msra.mxu0 0
      %332 = vmatprep.subr.bf16.mxu0 0
      %333 = vmatpush1.bf16.msra.mxu0 0
      %334 = vmatprep.subr.bf16.mxu0 0
      %335 = vmatpush1.bf16.msra.mxu0 0
      %336 = vmatprep.subr.bf16.mxu0 0
      %337 = vmatpush1.bf16.msra.mxu0 0
      %338 = vmatprep.subr.bf16.mxu0 0
      %339 = vmatpush1.bf16.msra.mxu0 0
      %340 = vmatprep.subr.bf16.mxu0 0
      %341 = vmatpush1.bf16.msra.mxu0 0
      %342 = vmatprep.mubr.bf16.mxu0 0
      %343 = vmatmul.mubr.bf16.gmra.mrb[0].mxu0 %v174
      %v344 = vpop.f32.mrb[0].mxu0
      %v345 = vadd.f32 %v96, %v344
      %v346 = vpop.f32.mrb[0].mxu0
      %v347 = vpop.f32.mrb[0].mxu0
      %v348 = vadd.f32 %v96, %v347
      %v349 = vpop.f32.mrb[0].mxu0
      %350 = vmatprep.mubr.bf16.mxu0 0
      %351 = vmatmul.mubr.bf16.gmra.mrb[0].mxu0 %v177
      %v352 = vpop.f32.mrb[0].mxu0
      %v353 = vadd.f32 %v96, %v352
      %v354 = vpop.f32.mrb[0].mxu0
      %v355 = vpop.f32.mrb[0].mxu0
      %v356 = vadd.f32 %v96, %v355
      %v357 = vpop.f32.mrb[0].mxu0
      %358 = vmatprep.mubr.bf16.mxu0 0
      %359 = vmatmul.mubr.bf16.gmra.mrb[0].mxu0 %v180
      %v360 = vpop.f32.mrb[0].mxu0
      %v361 = vadd.f32 %v96, %v360
      %v362 = vpop.f32.mrb[0].mxu0
      %v363 = vpop.f32.mrb[0].mxu0
      %v364 = vadd.f32 %v96, %v363
      %v365 = vpop.f32.mrb[0].mxu0
      %366 = vmatprep.mubr.bf16.mxu0 0
      %367 = vmatmul.mubr.bf16.gmra.mrb[0].mxu0 %v183
      %v368 = vpop.f32.mrb[0].mxu0
      %v369 = vadd.f32 %v96, %v368
      %v370 = vpop.f32.mrb[0].mxu0
      %v371 = vpop.f32.mrb[0].mxu0
      %v372 = vadd.f32 %v96, %v371
      %v373 = vpop.f32.mrb[0].mxu0
      %374 = vmatprep.mubr.bf16.mxu0 0
      %375 = vmatmul.mubr.bf16.gmra.mrb[0].mxu0 %v186
      %v376 = vpop.f32.mrb[0].mxu0
      %v377 = vadd.f32 %v96, %v376
      %v378 = vpop.f32.mrb[0].mxu0
      %v379 = vpop.f32.mrb[0].mxu0
      %v380 = vadd.f32 %v96, %v379
      %v381 = vpop.f32.mrb[0].mxu0
      %382 = vmatprep.mubr.bf16.mxu0 0
      %383 = vmatmul.mubr.bf16.gmra.mrb[0].mxu0 %v189
      %v384 = vpop.f32.mrb[0].mxu0
      %v385 = vadd.f32 %v96, %v384
      %v386 = vpop.f32.mrb[0].mxu0
      %v387 = vpop.f32.mrb[0].mxu0
      %v388 = vadd.f32 %v96, %v387
      %v389 = vpop.f32.mrb[0].mxu0
      %390 = vmatprep.mubr.bf16.mxu0 0
      %391 = vmatmul.mubr.bf16.gmra.mrb[0].mxu0 %v192
      %v392 = vpop.f32.mrb[0].mxu0
      %v393 = vadd.f32 %v96, %v392
      %v394 = vpop.f32.mrb[0].mxu0
      %v395 = vpop.f32.mrb[0].mxu0
      %v396 = vadd.f32 %v96, %v395
      %v397 = vpop.f32.mrb[0].mxu0
      %398 = vmatprep.mubr.bf16.mxu0 0
      %399 = vmatmul.mubr.bf16.gmra.mrb[0].mxu0 %v195
      %v400 = vpop.f32.mrb[0].mxu0
      %v401 = vadd.f32 %v96, %v400
      %v402 = vpop.f32.mrb[0].mxu0
      %v403 = vpop.f32.mrb[0].mxu0
      %v404 = vadd.f32 %v96, %v403
      %v405 = vpop.f32.mrb[0].mxu0
      %406 = vdwg.mxu0
      %v407 = vpack.c.bf16 %v236, %v232
      %v408 = vpack.c.bf16 %v238, %v234
      %v409 = vpack.c.bf16 %v348, %v345
      %v410 = vpack.c.bf16 %v246, %v242
      %v411 = vpack.c.bf16 %v248, %v244
      %v412 = vpack.c.bf16 %v356, %v353
      %v413 = vpack.c.bf16 %v256, %v252
      %v414 = vpack.c.bf16 %v258, %v254
      %v415 = vpack.c.bf16 %v364, %v361
      %v416 = vpack.c.bf16 %v266, %v262
      %v417 = vpack.c.bf16 %v268, %v264
      %v418 = vpack.c.bf16 %v372, %v369
      %v419 = vpack.c.bf16 %v276, %v272
      %v420 = vpack.c.bf16 %v278, %v274
      %v421 = vpack.c.bf16 %v380, %v377
      %v422 = vpack.c.bf16 %v286, %v282
      %v423 = vpack.c.bf16 %v288, %v284
      %v424 = vpack.c.bf16 %v388, %v385
      %v425 = vpack.c.bf16 %v296, %v292
      %v426 = vpack.c.bf16 %v298, %v294
      %v427 = vpack.c.bf16 %v396, %v393
      %v428 = vpack.c.bf16 %v306, %v302
      %v429 = vpack.c.bf16 %v308, %v304
      %v430 = vpack.c.bf16 %v404, %v401
      %431 = vst [vmem:[#allocation2] sm:$0xff] %v407
      %432 = vst [vmem:[#allocation2 + $0x8] sm:$0xff] %v408
      %433 = vst [vmem:[#allocation2 + $0x10] sm:$0xff] %v409
      %434 = vst [vmem:[#allocation2 + $0x18] sm:$0xff] %v410
      %435 = vst [vmem:[#allocation2 + $0x20] sm:$0xff] %v411
      %436 = vst [vmem:[#allocation2 + $0x28] sm:$0xff] %v412
      %437 = vst [vmem:[#allocation2 + $0x30] sm:$0xff] %v413
      %438 = vst [vmem:[#allocation2 + $0x38] sm:$0xff] %v414
      %439 = vst [vmem:[#allocation2 + $0x40] sm:$0xff] %v415
      %440 = vst [vmem:[#allocation2 + $0x48] sm:$0xff] %v416
      %441 = vst [vmem:[#allocation2 + $0x50] sm:$0xff] %v417
      %442 = vst [vmem:[#allocation2 + $0x58] sm:$0xff] %v418
      %443 = vst [vmem:[#allocation2 + $0x60] sm:$0xff] %v419
      %444 = vst [vmem:[#allocation2 + $0x68] sm:$0xff] %v420
      %445 = vst [vmem:[#allocation2 + $0x70] sm:$0xff] %v421
      %446 = vst [vmem:[#allocation2 + $0x78] sm:$0xff] %v422
      %447 = vst [vmem:[#allocation2 + $0x80] sm:$0xff] %v423
      %448 = vst [vmem:[#allocation2 + $0x88] sm:$0xff] %v424
      %449 = vst [vmem:[#allocation2 + $0x90] sm:$0xff] %v425
      %450 = vst [vmem:[#allocation2 + $0x98] sm:$0xff] %v426
      %451 = vst [vmem:[#allocation2 + $0xa0] sm:$0xff] %v427
      %452 = vst [vmem:[#allocation2 + $0xa8] sm:$0xff] %v428
      %453 = vst [vmem:[#allocation2 + $0xb0] sm:$0xff] %v429
      %454 = vst [vmem:[#allocation2 + $0xb8] sm:$0xff] %v430
      %v455 = vld [vmem:[%s2] sm:$0xff]
      %v456 = vld [vmem:[%s2 + $0x8] sm:$0xff]
      %v457 = vld [vmem:[#allocation6] sm:$0xff]
      %v458 = vld [vmem:[#allocation6 + $0x8] sm:$0xf]
      %v459 = vld [vmem:[#allocation6 + $0xc] sm:$0xff]
      %v460 = vld [vmem:[#allocation6 + $0x14] sm:$0xf]
      %v461 = vld [vmem:[#allocation6 + $0x18] sm:$0xff]
      %v462 = vld [vmem:[#allocation6 + $0x20] sm:$0xf]
      %v463 = vld [vmem:[#allocation6 + $0x24] sm:$0xff]
      %v464 = vld [vmem:[#allocation6 + $0x2c] sm:$0xf]
      %v465 = vld [vmem:[#allocation6 + $0x30] sm:$0xff]
      %v466 = vld [vmem:[#allocation6 + $0x38] sm:$0xf]
      %v467 = vld [vmem:[#allocation6 + $0x3c] sm:$0xff]
      %v468 = vld [vmem:[#allocation6 + $0x44] sm:$0xf]
      %v469 = vld [vmem:[#allocation6 + $0x48] sm:$0xff]
      %v470 = vld [vmem:[#allocation6 + $0x50] sm:$0xf]
      %v471 = vld [vmem:[#allocation6 + $0x54] sm:$0xff]
      %v472 = vld [vmem:[#allocation6 + $0x5c] sm:$0xf]
      %v473 = vld [vmem:[#allocation6 + $0x60] sm:$0xff]
      %v474 = vld [vmem:[#allocation6 + $0x68] sm:$0xf]
      %v475 = vld [vmem:[#allocation6 + $0x6c] sm:$0xff]
      %v476 = vld [vmem:[#allocation6 + $0x74] sm:$0xf]
      %v477 = vld [vmem:[#allocation6 + $0x78] sm:$0xff]
      %v478 = vld [vmem:[#allocation6 + $0x80] sm:$0xf]
      %v479 = vld [vmem:[#allocation6 + $0x84] sm:$0xff]
      %v480 = vld [vmem:[#allocation6 + $0x8c] sm:$0xf]
      %v481 = vld [vmem:[#allocation6 + $0x90] sm:$0xff]
      %v482 = vld [vmem:[#allocation6 + $0x98] sm:$0xf]
      %v483 = vld [vmem:[#allocation6 + $0x9c] sm:$0xff]
      %v484 = vld [vmem:[#allocation6 + $0xa4] sm:$0xf]
      %v485 = vld [vmem:[#allocation6 + $0xa8] sm:$0xff]
      %v486 = vld [vmem:[#allocation6 + $0xb0] sm:$0xf]
      %v487 = vld [vmem:[#allocation6 + $0xb4] sm:$0xff]
      %v488 = vld [vmem:[#allocation6 + $0xbc] sm:$0xf]
      %v489 = vld [vmem:[%s6] sm:$0x7]
      %v490 = vld [vmem:[#allocation3] sm:$0xff]
      %v491 = vld [vmem:[#allocation3 + $0x8] sm:$0xff]
      %s492 = smul.u32 0, 3
      %s493 = smul.addr %s492, 8
      %s494 = scalar_lea.vmem [#allocation2], %s493
      %v495 = vld [vmem:[%s494] sm:$0xff]
      %v496 = vld [vmem:[%s494 + $0x8] sm:$0xff]
      %v497 = vld [vmem:[%s494 + $0x10] sm:$0xff]
      %v498 = vunpack.c.l.bf16 %v495
      %v499 = vunpack.c.l.bf16 %v496
      %v500 = vunpack.c.l.bf16 %v497
      %v501 = vunpack.c.h.bf16 %v495
      %v502 = vunpack.c.h.bf16 %v496
      %v503 = vunpack.c.h.bf16 %v497
      %v504 = vpack.c.bf16 %v491, %v490
      %v506 = vlaneseq
      %v507 = vshrl.u32 %v506, 7
      %v508 = vsub.s32 0, %v507
      %v509 = vrot.slane %v489, %v508
      %v510 = vlaneseq
      %v511 = vshrl.u32 %v510, 7
      %v512 = vsub.s32 1, %v511
      %v513 = vrot.slane %v489, %v512
      %v514 = vlaneseq
      %v515 = vshrl.u32 %v514, 7
      %v516 = vsub.s32 2, %v515
      %v517 = vrot.slane %v489, %v516
      %v553 = vunpack.c.l.b16 %v457
      %v554 = vunpack.c.h.b16 %v457
      %v555 = vunpack.c.l.b16 %v458
      %v556 = vunpack.c.l.b16 %v459
      %v557 = vunpack.c.h.b16 %v459
      %v558 = vunpack.c.l.b16 %v460
      %v559 = vunpack.c.l.b16 %v461
      %v560 = vunpack.c.h.b16 %v461
      %v561 = vunpack.c.l.b16 %v462
      %v562 = vunpack.c.l.b16 %v463
      %v563 = vunpack.c.h.b16 %v463
      %v564 = vunpack.c.l.b16 %v464
      %v565 = vunpack.c.l.b16 %v465
      %v566 = vunpack.c.h.b16 %v465
      %v567 = vunpack.c.l.b16 %v466
      %v568 = vunpack.c.l.b16 %v467
      %v569 = vunpack.c.h.b16 %v467
      %v570 = vunpack.c.l.b16 %v468
      %v571 = vunpack.c.l.b16 %v469
      %v572 = vunpack.c.h.b16 %v469
      %v573 = vunpack.c.l.b16 %v470
      %v574 = vunpack.c.l.b16 %v471
      %v575 = vunpack.c.h.b16 %v471
      %v576 = vunpack.c.l.b16 %v472
      %v577 = vunpack.c.l.b16 %v473
      %v578 = vunpack.c.h.b16 %v473
      %v579 = vunpack.c.l.b16 %v474
      %v580 = vunpack.c.l.b16 %v475
      %v581 = vunpack.c.h.b16 %v475
      %v582 = vunpack.c.l.b16 %v476
      %v583 = vunpack.c.l.b16 %v477
      %v584 = vunpack.c.h.b16 %v477
      %v585 = vunpack.c.l.b16 %v478
      %v586 = vunpack.c.l.b16 %v479
      %v587 = vunpack.c.h.b16 %v479
      %v588 = vunpack.c.l.b16 %v480
      %v589 = vunpack.c.l.b16 %v481
      %v590 = vunpack.c.h.b16 %v481
      %v591 = vunpack.c.l.b16 %v482
      %v592 = vunpack.c.l.b16 %v483
      %v593 = vunpack.c.h.b16 %v483
      %v594 = vunpack.c.l.b16 %v484
      %v595 = vunpack.c.l.b16 %v485
      %v596 = vunpack.c.h.b16 %v485
      %v597 = vunpack.c.l.b16 %v486
      %v598 = vunpack.c.l.b16 %v487
      %v599 = vunpack.c.h.b16 %v487
      %v600 = vunpack.c.l.b16 %v488
      %v601 = vpack.c.b16 %v556, %v553
      %v602 = vpack.c.b16 %v557, %v554
      %v603 = vpack.c.b16 %v558, %v555
      %v604 = vpack.c.b16 %v562, %v559
      %v605 = vpack.c.b16 %v563, %v560
      %v606 = vpack.c.b16 %v564, %v561
      %v607 = vpack.c.b16 %v568, %v565
      %v608 = vpack.c.b16 %v569, %v566
      %v609 = vpack.c.b16 %v570, %v567
      %v610 = vpack.c.b16 %v574, %v571
      %v611 = vpack.c.b16 %v575, %v572
      %v612 = vpack.c.b16 %v576, %v573
      %v613 = vpack.c.b16 %v580, %v577
      %v614 = vpack.c.b16 %v581, %v578
      %v615 = vpack.c.b16 %v582, %v579
      %v616 = vpack.c.b16 %v586, %v583
      %v617 = vpack.c.b16 %v587, %v584
      %v618 = vpack.c.b16 %v588, %v585
      %v619 = vpack.c.b16 %v592, %v589
      %v620 = vpack.c.b16 %v593, %v590
      %v621 = vpack.c.b16 %v594, %v591
      %v622 = vpack.c.b16 %v598, %v595
      %v623 = vpack.c.b16 %v599, %v596
      %v624 = vpack.c.b16 %v600, %v597
      %649 = vmatprep.subr.bf16.mxu0 %v602
      %650 = vmatpush1.bf16.msra.mxu0 %v601
      %651 = vmatprep.subr.bf16.mxu0 %v605
      %652 = vmatpush1.bf16.msra.mxu0 %v604
      %653 = vmatprep.subr.bf16.mxu0 %v608
      %654 = vmatpush1.bf16.msra.mxu0 %v607
      %655 = vmatprep.subr.bf16.mxu0 %v611
      %656 = vmatpush1.bf16.msra.mxu0 %v610
      %657 = vmatprep.subr.bf16.mxu0 %v614
      %658 = vmatpush1.bf16.msra.mxu0 %v613
      %659 = vmatprep.subr.bf16.mxu0 %v617
      %660 = vmatpush1.bf16.msra.mxu0 %v616
      %661 = vmatprep.subr.bf16.mxu0 %v620
      %662 = vmatpush1.bf16.msra.mxu0 %v619
      %663 = vmatprep.subr.bf16.mxu0 %v623
      %664 = vmatpush1.bf16.msra.mxu0 %v622
      %665 = vmatprep.subr.bf16.mxu0 0
      %666 = vmatpush1.bf16.msra.mxu0 0
      %667 = vmatprep.subr.bf16.mxu0 0
      %668 = vmatpush1.bf16.msra.mxu0 0
      %669 = vmatprep.subr.bf16.mxu0 0
      %670 = vmatpush1.bf16.msra.mxu0 0
      %671 = vmatprep.subr.bf16.mxu0 0
      %672 = vmatpush1.bf16.msra.mxu0 0
      %673 = vmatprep.subr.bf16.mxu0 0
      %674 = vmatpush1.bf16.msra.mxu0 0
      %675 = vmatprep.subr.bf16.mxu0 0
      %676 = vmatpush1.bf16.msra.mxu0 0
      %677 = vmatprep.subr.bf16.mxu0 0
      %678 = vmatpush1.bf16.msra.mxu0 0
      %679 = vmatprep.subr.bf16.mxu0 0
      %680 = vmatpush1.bf16.msra.mxu0 0
      %681 = vmatprep.mubr.bf16.mxu0 0
      %682 = vmatmul.mubr.bf16.gmra.mrb[0].mxu0 %v504
      %v683 = vpop.f32.mrb[0].mxu0
      %v684 = vadd.f32 %v509, %v683
      %v685 = vpop.f32.mrb[0].mxu0
      %v686 = vadd.f32 %v513, %v685
      %v687 = vpop.f32.mrb[0].mxu0
      %v688 = vadd.f32 %v509, %v687
      %v689 = vpop.f32.mrb[0].mxu0
      %v690 = vadd.f32 %v513, %v689
      %691 = vdwg.mxu0
      %692 = vmatprep.subr.bf16.mxu0 0
      %693 = vmatpush1.bf16.msra.mxu0 %v603
      %694 = vmatprep.subr.bf16.mxu0 0
      %695 = vmatpush1.bf16.msra.mxu0 %v606
      %696 = vmatprep.subr.bf16.mxu0 0
      %697 = vmatpush1.bf16.msra.mxu0 %v609
      %698 = vmatprep.subr.bf16.mxu0 0
      %699 = vmatpush1.bf16.msra.mxu0 %v612
      %700 = vmatprep.subr.bf16.mxu0 0
      %701 = vmatpush1.bf16.msra.mxu0 %v615
      %702 = vmatprep.subr.bf16.mxu0 0
      %703 = vmatpush1.bf16.msra.mxu0 %v618
      %704 = vmatprep.subr.bf16.mxu0 0
      %705 = vmatpush1.bf16.msra.mxu0 %v621
      %706 = vmatprep.subr.bf16.mxu0 0
      %707 = vmatpush1.bf16.msra.mxu0 %v624
      %708 = vmatprep.subr.bf16.mxu0 0
      %709 = vmatpush1.bf16.msra.mxu0 0
      %710 = vmatprep.subr.bf16.mxu0 0
      %711 = vmatpush1.bf16.msra.mxu0 0
      %712 = vmatprep.subr.bf16.mxu0 0
      %713 = vmatpush1.bf16.msra.mxu0 0
      %714 = vmatprep.subr.bf16.mxu0 0
      %715 = vmatpush1.bf16.msra.mxu0 0
      %716 = vmatprep.subr.bf16.mxu0 0
      %717 = vmatpush1.bf16.msra.mxu0 0
      %718 = vmatprep.subr.bf16.mxu0 0
      %719 = vmatpush1.bf16.msra.mxu0 0
      %720 = vmatprep.subr.bf16.mxu0 0
      %721 = vmatpush1.bf16.msra.mxu0 0
      %722 = vmatprep.subr.bf16.mxu0 0
      %723 = vmatpush1.bf16.msra.mxu0 0
      %724 = vmatprep.mubr.bf16.mxu0 0
      %725 = vmatmul.mubr.bf16.gmra.mrb[0].mxu0 %v504
      %v726 = vpop.f32.mrb[0].mxu0
      %v727 = vadd.f32 %v517, %v726
      %v728 = vpop.f32.mrb[0].mxu0
      %v729 = vpop.f32.mrb[0].mxu0
      %v730 = vadd.f32 %v517, %v729
      %v731 = vpop.f32.mrb[0].mxu0
      %732 = vdwg.mxu0
      %v733 = vadd.f32 %v498, %v684
      %v734 = vadd.f32 %v501, %v688
      %v735 = vmul.f32 %v733, 0.5
      %v736 = vmul.f32 %v734, 0.5
      %v737 = vtanh.pop %v735
      %v738 = vtanh.pop %v736
      %v739 = vadd.f32 %v737, 1.0
      %v740 = vadd.f32 %v738, 1.0
      %v741 = vmul.f32 %v739, 0.5
      %v742 = vmul.f32 %v740, 0.5
      %v743 = vadd.f32 %v499, %v686
      %v744 = vadd.f32 %v502, %v690
      %v745 = vmul.f32 %v743, 0.5
      %v746 = vmul.f32 %v744, 0.5
      %v747 = vtanh.pop %v745
      %v748 = vtanh.pop %v746
      %v749 = vadd.f32 %v747, 1.0
      %v750 = vadd.f32 %v748, 1.0
      %v751 = vmul.f32 %v749, 0.5
      %v752 = vmul.f32 %v750, 0.5
      %v753 = vmul.f32 %v741, %v727
      %v754 = vmul.f32 %v742, %v730
      %v755 = vadd.f32 %v500, %v753
      %v756 = vadd.f32 %v503, %v754
      %v757 = vtanh.pop %v755
      %v758 = vtanh.pop %v756
      %v759 = vsub.f32 1.0, %v751
      %v760 = vsub.f32 1.0, %v752
      %v761 = vmul.f32 %v759, %v757
      %v762 = vmul.f32 %v760, %v758
      %v763 = vmul.f32 %v751, %v490
      %v764 = vmul.f32 %v752, %v491
      %v765 = vadd.f32 %v761, %v763
      %v766 = vadd.f32 %v762, %v764
      %v767 = vstv %s53
      %vm768 = vcmp.lt.s32.totalorder %v767, %v455
      %vm769 = vcmp.lt.s32.totalorder %v767, %v456
      %v770 = vsel %vm768, 1, 0
      %v771 = vsel %vm769, 1, 0
      %772 = vset.pattern.permute.xlu0 0
      %773 = vperm.xlu0 %772, %v770
      %v774 = vpop.permute.xlu0 %773
      %775 = vset.pattern.permute.xlu0 0
      %776 = vperm.xlu0 %775, %v771
      %v777 = vpop.permute.xlu0 %776
      %vm778 = vcmp.eq.s32.totalorder %v774, 1
      %vm779 = vcmp.eq.s32.totalorder %v777, 1
      %v780 = vsel %vm778, %v765, %v490
      %v781 = vsel %vm779, %v766, %v491
      %s782 = smul.u32 1, 3
      %s783 = smul.addr %s782, 8
      %s784 = scalar_lea.vmem [#allocation2], %s783
      %v785 = vld [vmem:[%s784] sm:$0xff]
      %v786 = vld [vmem:[%s784 + $0x8] sm:$0xff]
      %v787 = vld [vmem:[%s784 + $0x10] sm:$0xff]
      %v788 = vunpack.c.l.bf16 %v785
      %v789 = vunpack.c.l.bf16 %v786
      %v790 = vunpack.c.l.bf16 %v787
      %v791 = vunpack.c.h.bf16 %v785
      %v792 = vunpack.c.h.bf16 %v786
      %v793 = vunpack.c.h.bf16 %v787
      %v794 = vpack.c.bf16 %v781, %v780
      %795 = vmatprep.subr.bf16.mxu0 %v602
      %796 = vmatpush1.bf16.msra.mxu0 %v601
      %797 = vmatprep.subr.bf16.mxu0 %v605
      %798 = vmatpush1.bf16.msra.mxu0 %v604
      %799 = vmatprep.subr.bf16.mxu0 %v608
      %800 = vmatpush1.bf16.msra.mxu0 %v607
      %801 = vmatprep.subr.bf16.mxu0 %v611
      %802 = vmatpush1.bf16.msra.mxu0 %v610
      %803 = vmatprep.subr.bf16.mxu0 %v614
      %804 = vmatpush1.bf16.msra.mxu0 %v613
      %805 = vmatprep.subr.bf16.mxu0 %v617
      %806 = vmatpush1.bf16.msra.mxu0 %v616
      %807 = vmatprep.subr.bf16.mxu0 %v620
      %808 = vmatpush1.bf16.msra.mxu0 %v619
      %809 = vmatprep.subr.bf16.mxu0 %v623
      %810 = vmatpush1.bf16.msra.mxu0 %v622
      %811 = vmatprep.subr.bf16.mxu0 0
      %812 = vmatpush1.bf16.msra.mxu0 0
      %813 = vmatprep.subr.bf16.mxu0 0
      %814 = vmatpush1.bf16.msra.mxu0 0
      %815 = vmatprep.subr.bf16.mxu0 0
      %816 = vmatpush1.bf16.msra.mxu0 0
      %817 = vmatprep.subr.bf16.mxu0 0
      %818 = vmatpush1.bf16.msra.mxu0 0
      %819 = vmatprep.subr.bf16.mxu0 0
      %820 = vmatpush1.bf16.msra.mxu0 0
      %821 = vmatprep.subr.bf16.mxu0 0
      %822 = vmatpush1.bf16.msra.mxu0 0
      %823 = vmatprep.subr.bf16.mxu0 0
      %824 = vmatpush1.bf16.msra.mxu0 0
      %825 = vmatprep.subr.bf16.mxu0 0
      %826 = vmatpush1.bf16.msra.mxu0 0
      %827 = vmatprep.mubr.bf16.mxu0 0
      %828 = vmatmul.mubr.bf16.gmra.mrb[0].mxu0 %v794
      %v829 = vpop.f32.mrb[0].mxu0
      %v830 = vadd.f32 %v509, %v829
      %v831 = vpop.f32.mrb[0].mxu0
      %v832 = vadd.f32 %v513, %v831
      %v833 = vpop.f32.mrb[0].mxu0
      %v834 = vadd.f32 %v509, %v833
      %v835 = vpop.f32.mrb[0].mxu0
      %v836 = vadd.f32 %v513, %v835
      %837 = vdwg.mxu0
      %838 = vmatprep.subr.bf16.mxu0 0
      %839 = vmatpush1.bf16.msra.mxu0 %v603
      %840 = vmatprep.subr.bf16.mxu0 0
      %841 = vmatpush1.bf16.msra.mxu0 %v606
      %842 = vmatprep.subr.bf16.mxu0 0
      %843 = vmatpush1.bf16.msra.mxu0 %v609
      %844 = vmatprep.subr.bf16.mxu0 0
      %845 = vmatpush1.bf16.msra.mxu0 %v612
      %846 = vmatprep.subr.bf16.mxu0 0
      %847 = vmatpush1.bf16.msra.mxu0 %v615
      %848 = vmatprep.subr.bf16.mxu0 0
      %849 = vmatpush1.bf16.msra.mxu0 %v618
      %850 = vmatprep.subr.bf16.mxu0 0
      %851 = vmatpush1.bf16.msra.mxu0 %v621
      %852 = vmatprep.subr.bf16.mxu0 0
      %853 = vmatpush1.bf16.msra.mxu0 %v624
      %854 = vmatprep.subr.bf16.mxu0 0
      %855 = vmatpush1.bf16.msra.mxu0 0
      %856 = vmatprep.subr.bf16.mxu0 0
      %857 = vmatpush1.bf16.msra.mxu0 0
      %858 = vmatprep.subr.bf16.mxu0 0
      %859 = vmatpush1.bf16.msra.mxu0 0
      %860 = vmatprep.subr.bf16.mxu0 0
      %861 = vmatpush1.bf16.msra.mxu0 0
      %862 = vmatprep.subr.bf16.mxu0 0
      %863 = vmatpush1.bf16.msra.mxu0 0
      %864 = vmatprep.subr.bf16.mxu0 0
      %865 = vmatpush1.bf16.msra.mxu0 0
      %866 = vmatprep.subr.bf16.mxu0 0
      %867 = vmatpush1.bf16.msra.mxu0 0
      %868 = vmatprep.subr.bf16.mxu0 0
      %869 = vmatpush1.bf16.msra.mxu0 0
      %870 = vmatprep.mubr.bf16.mxu0 0
      %871 = vmatmul.mubr.bf16.gmra.mrb[0].mxu0 %v794
      %v872 = vpop.f32.mrb[0].mxu0
      %v873 = vadd.f32 %v517, %v872
      %v874 = vpop.f32.mrb[0].mxu0
      %v875 = vpop.f32.mrb[0].mxu0
      %v876 = vadd.f32 %v517, %v875
      %v877 = vpop.f32.mrb[0].mxu0
      %878 = vdwg.mxu0
      %v879 = vadd.f32 %v788, %v830
      %v880 = vadd.f32 %v791, %v834
      %v881 = vmul.f32 %v879, 0.5
      %v882 = vmul.f32 %v880, 0.5
      %v883 = vtanh.pop %v881
      %v884 = vtanh.pop %v882
      %v885 = vadd.f32 %v883, 1.0
      %v886 = vadd.f32 %v884, 1.0
      %v887 = vmul.f32 %v885, 0.5
      %v888 = vmul.f32 %v886, 0.5
      %v889 = vadd.f32 %v789, %v832
      %v890 = vadd.f32 %v792, %v836
      %v891 = vmul.f32 %v889, 0.5
      %v892 = vmul.f32 %v890, 0.5
      %v893 = vtanh.pop %v891
      %v894 = vtanh.pop %v892
      %v895 = vadd.f32 %v893, 1.0
      %v896 = vadd.f32 %v894, 1.0
      %v897 = vmul.f32 %v895, 0.5
      %v898 = vmul.f32 %v896, 0.5
      %v899 = vmul.f32 %v887, %v873
      %v900 = vmul.f32 %v888, %v876
      %v901 = vadd.f32 %v790, %v899
      %v902 = vadd.f32 %v793, %v900
      %v903 = vtanh.pop %v901
      %v904 = vtanh.pop %v902
      %v905 = vsub.f32 1.0, %v897
      %v906 = vsub.f32 1.0, %v898
      %v907 = vmul.f32 %v905, %v903
      %v908 = vmul.f32 %v906, %v904
      %v909 = vmul.f32 %v897, %v780
      %v910 = vmul.f32 %v898, %v781
      %v911 = vadd.f32 %v907, %v909
      %v912 = vadd.f32 %v908, %v910
      %s913 = sadd.s32 %s53, 1
      %v914 = vstv %s913
      %vm915 = vcmp.lt.s32.totalorder %v914, %v455
      %vm916 = vcmp.lt.s32.totalorder %v914, %v456
      %v917 = vsel %vm915, 1, 0
      %v918 = vsel %vm916, 1, 0
      %919 = vset.pattern.permute.xlu0 0
      %920 = vperm.xlu0 %919, %v917
      %v921 = vpop.permute.xlu0 %920
      %922 = vset.pattern.permute.xlu0 0
      %923 = vperm.xlu0 %922, %v918
      %v924 = vpop.permute.xlu0 %923
      %vm925 = vcmp.eq.s32.totalorder %v921, 1
      %vm926 = vcmp.eq.s32.totalorder %v924, 1
      %v927 = vsel %vm925, %v911, %v780
      %v928 = vsel %vm926, %v912, %v781
      %s929 = smul.u32 2, 3
      %s930 = smul.addr %s929, 8
      %s931 = scalar_lea.vmem [#allocation2], %s930
      %v932 = vld [vmem:[%s931] sm:$0xff]
      %v933 = vld [vmem:[%s931 + $0x8] sm:$0xff]
      %v934 = vld [vmem:[%s931 + $0x10] sm:$0xff]
      %v935 = vunpack.c.l.bf16 %v932
      %v936 = vunpack.c.l.bf16 %v933
      %v937 = vunpack.c.l.bf16 %v934
      %v938 = vunpack.c.h.bf16 %v932
      %v939 = vunpack.c.h.bf16 %v933
      %v940 = vunpack.c.h.bf16 %v934
      %v941 = vpack.c.bf16 %v928, %v927
      %942 = vmatprep.subr.bf16.mxu0 %v602
      %943 = vmatpush1.bf16.msra.mxu0 %v601
      %944 = vmatprep.subr.bf16.mxu0 %v605
      %945 = vmatpush1.bf16.msra.mxu0 %v604
      %946 = vmatprep.subr.bf16.mxu0 %v608
      %947 = vmatpush1.bf16.msra.mxu0 %v607
      %948 = vmatprep.subr.bf16.mxu0 %v611
      %949 = vmatpush1.bf16.msra.mxu0 %v610
      %950 = vmatprep.subr.bf16.mxu0 %v614
      %951 = vmatpush1.bf16.msra.mxu0 %v613
      %952 = vmatprep.subr.bf16.mxu0 %v617
      %953 = vmatpush1.bf16.msra.mxu0 %v616
      %954 = vmatprep.subr.bf16.mxu0 %v620
      %955 = vmatpush1.bf16.msra.mxu0 %v619
      %956 = vmatprep.subr.bf16.mxu0 %v623
      %957 = vmatpush1.bf16.msra.mxu0 %v622
      %958 = vmatprep.subr.bf16.mxu0 0
      %959 = vmatpush1.bf16.msra.mxu0 0
      %960 = vmatprep.subr.bf16.mxu0 0
      %961 = vmatpush1.bf16.msra.mxu0 0
      %962 = vmatprep.subr.bf16.mxu0 0
      %963 = vmatpush1.bf16.msra.mxu0 0
      %964 = vmatprep.subr.bf16.mxu0 0
      %965 = vmatpush1.bf16.msra.mxu0 0
      %966 = vmatprep.subr.bf16.mxu0 0
      %967 = vmatpush1.bf16.msra.mxu0 0
      %968 = vmatprep.subr.bf16.mxu0 0
      %969 = vmatpush1.bf16.msra.mxu0 0
      %970 = vmatprep.subr.bf16.mxu0 0
      %971 = vmatpush1.bf16.msra.mxu0 0
      %972 = vmatprep.subr.bf16.mxu0 0
      %973 = vmatpush1.bf16.msra.mxu0 0
      %974 = vmatprep.mubr.bf16.mxu0 0
      %975 = vmatmul.mubr.bf16.gmra.mrb[0].mxu0 %v941
      %v976 = vpop.f32.mrb[0].mxu0
      %v977 = vadd.f32 %v509, %v976
      %v978 = vpop.f32.mrb[0].mxu0
      %v979 = vadd.f32 %v513, %v978
      %v980 = vpop.f32.mrb[0].mxu0
      %v981 = vadd.f32 %v509, %v980
      %v982 = vpop.f32.mrb[0].mxu0
      %v983 = vadd.f32 %v513, %v982
      %984 = vdwg.mxu0
      %985 = vmatprep.subr.bf16.mxu0 0
      %986 = vmatpush1.bf16.msra.mxu0 %v603
      %987 = vmatprep.subr.bf16.mxu0 0
      %988 = vmatpush1.bf16.msra.mxu0 %v606
      %989 = vmatprep.subr.bf16.mxu0 0
      %990 = vmatpush1.bf16.msra.mxu0 %v609
      %991 = vmatprep.subr.bf16.mxu0 0
      %992 = vmatpush1.bf16.msra.mxu0 %v612
      %993 = vmatprep.subr.bf16.mxu0 0
      %994 = vmatpush1.bf16.msra.mxu0 %v615
      %995 = vmatprep.subr.bf16.mxu0 0
      %996 = vmatpush1.bf16.msra.mxu0 %v618
      %997 = vmatprep.subr.bf16.mxu0 0
      %998 = vmatpush1.bf16.msra.mxu0 %v621
      %999 = vmatprep.subr.bf16.mxu0 0
      %1000 = vmatpush1.bf16.msra.mxu0 %v624
      %1001 = vmatprep.subr.bf16.mxu0 0
      %1002 = vmatpush1.bf16.msra.mxu0 0
      %1003 = vmatprep.subr.bf16.mxu0 0
      %1004 = vmatpush1.bf16.msra.mxu0 0
      %1005 = vmatprep.subr.bf16.mxu0 0
      %1006 = vmatpush1.bf16.msra.mxu0 0
      %1007 = vmatprep.subr.bf16.mxu0 0
      %1008 = vmatpush1.bf16.msra.mxu0 0
      %1009 = vmatprep.subr.bf16.mxu0 0
      %1010 = vmatpush1.bf16.msra.mxu0 0
      %1011 = vmatprep.subr.bf16.mxu0 0
      %1012 = vmatpush1.bf16.msra.mxu0 0
      %1013 = vmatprep.subr.bf16.mxu0 0
      %1014 = vmatpush1.bf16.msra.mxu0 0
      %1015 = vmatprep.subr.bf16.mxu0 0
      %1016 = vmatpush1.bf16.msra.mxu0 0
      %1017 = vmatprep.mubr.bf16.mxu0 0
      %1018 = vmatmul.mubr.bf16.gmra.mrb[0].mxu0 %v941
      %v1019 = vpop.f32.mrb[0].mxu0
      %v1020 = vadd.f32 %v517, %v1019
      %v1021 = vpop.f32.mrb[0].mxu0
      %v1022 = vpop.f32.mrb[0].mxu0
      %v1023 = vadd.f32 %v517, %v1022
      %v1024 = vpop.f32.mrb[0].mxu0
      %1025 = vdwg.mxu0
      %v1026 = vadd.f32 %v935, %v977
      %v1027 = vadd.f32 %v938, %v981
      %v1028 = vmul.f32 %v1026, 0.5
      %v1029 = vmul.f32 %v1027, 0.5
      %v1030 = vtanh.pop %v1028
      %v1031 = vtanh.pop %v1029
      %v1032 = vadd.f32 %v1030, 1.0
      %v1033 = vadd.f32 %v1031, 1.0
      %v1034 = vmul.f32 %v1032, 0.5
      %v1035 = vmul.f32 %v1033, 0.5
      %v1036 = vadd.f32 %v936, %v979
      %v1037 = vadd.f32 %v939, %v983
      %v1038 = vmul.f32 %v1036, 0.5
      %v1039 = vmul.f32 %v1037, 0.5
      %v1040 = vtanh.pop %v1038
      %v1041 = vtanh.pop %v1039
      %v1042 = vadd.f32 %v1040, 1.0
      %v1043 = vadd.f32 %v1041, 1.0
      %v1044 = vmul.f32 %v1042, 0.5
      %v1045 = vmul.f32 %v1043, 0.5
      %v1046 = vmul.f32 %v1034, %v1020
      %v1047 = vmul.f32 %v1035, %v1023
      %v1048 = vadd.f32 %v937, %v1046
      %v1049 = vadd.f32 %v940, %v1047
      %v1050 = vtanh.pop %v1048
      %v1051 = vtanh.pop %v1049
      %v1052 = vsub.f32 1.0, %v1044
      %v1053 = vsub.f32 1.0, %v1045
      %v1054 = vmul.f32 %v1052, %v1050
      %v1055 = vmul.f32 %v1053, %v1051
      %v1056 = vmul.f32 %v1044, %v927
      %v1057 = vmul.f32 %v1045, %v928
      %v1058 = vadd.f32 %v1054, %v1056
      %v1059 = vadd.f32 %v1055, %v1057
      %s1060 = sadd.s32 %s53, 2
      %v1061 = vstv %s1060
      %vm1062 = vcmp.lt.s32.totalorder %v1061, %v455
      %vm1063 = vcmp.lt.s32.totalorder %v1061, %v456
      %v1064 = vsel %vm1062, 1, 0
      %v1065 = vsel %vm1063, 1, 0
      %1066 = vset.pattern.permute.xlu0 0
      %1067 = vperm.xlu0 %1066, %v1064
      %v1068 = vpop.permute.xlu0 %1067
      %1069 = vset.pattern.permute.xlu0 0
      %1070 = vperm.xlu0 %1069, %v1065
      %v1071 = vpop.permute.xlu0 %1070
      %vm1072 = vcmp.eq.s32.totalorder %v1068, 1
      %vm1073 = vcmp.eq.s32.totalorder %v1071, 1
      %v1074 = vsel %vm1072, %v1058, %v927
      %v1075 = vsel %vm1073, %v1059, %v928
      %s1076 = smul.u32 3, 3
      %s1077 = smul.addr %s1076, 8
      %s1078 = scalar_lea.vmem [#allocation2], %s1077
      %v1079 = vld [vmem:[%s1078] sm:$0xff]
      %v1080 = vld [vmem:[%s1078 + $0x8] sm:$0xff]
      %v1081 = vld [vmem:[%s1078 + $0x10] sm:$0xff]
      %v1082 = vunpack.c.l.bf16 %v1079
      %v1083 = vunpack.c.l.bf16 %v1080
      %v1084 = vunpack.c.l.bf16 %v1081
      %v1085 = vunpack.c.h.bf16 %v1079
      %v1086 = vunpack.c.h.bf16 %v1080
      %v1087 = vunpack.c.h.bf16 %v1081
      %v1088 = vpack.c.bf16 %v1075, %v1074
      %1089 = vmatprep.subr.bf16.mxu0 %v602
      %1090 = vmatpush1.bf16.msra.mxu0 %v601
      %1091 = vmatprep.subr.bf16.mxu0 %v605
      %1092 = vmatpush1.bf16.msra.mxu0 %v604
      %1093 = vmatprep.subr.bf16.mxu0 %v608
      %1094 = vmatpush1.bf16.msra.mxu0 %v607
      %1095 = vmatprep.subr.bf16.mxu0 %v611
      %1096 = vmatpush1.bf16.msra.mxu0 %v610
      %1097 = vmatprep.subr.bf16.mxu0 %v614
      %1098 = vmatpush1.bf16.msra.mxu0 %v613
      %1099 = vmatprep.subr.bf16.mxu0 %v617
      %1100 = vmatpush1.bf16.msra.mxu0 %v616
      %1101 = vmatprep.subr.bf16.mxu0 %v620
      %1102 = vmatpush1.bf16.msra.mxu0 %v619
      %1103 = vmatprep.subr.bf16.mxu0 %v623
      %1104 = vmatpush1.bf16.msra.mxu0 %v622
      %1105 = vmatprep.subr.bf16.mxu0 0
      %1106 = vmatpush1.bf16.msra.mxu0 0
      %1107 = vmatprep.subr.bf16.mxu0 0
      %1108 = vmatpush1.bf16.msra.mxu0 0
      %1109 = vmatprep.subr.bf16.mxu0 0
      %1110 = vmatpush1.bf16.msra.mxu0 0
      %1111 = vmatprep.subr.bf16.mxu0 0
      %1112 = vmatpush1.bf16.msra.mxu0 0
      %1113 = vmatprep.subr.bf16.mxu0 0
      %1114 = vmatpush1.bf16.msra.mxu0 0
      %1115 = vmatprep.subr.bf16.mxu0 0
      %1116 = vmatpush1.bf16.msra.mxu0 0
      %1117 = vmatprep.subr.bf16.mxu0 0
      %1118 = vmatpush1.bf16.msra.mxu0 0
      %1119 = vmatprep.subr.bf16.mxu0 0
      %1120 = vmatpush1.bf16.msra.mxu0 0
      %1121 = vmatprep.mubr.bf16.mxu0 0
      %1122 = vmatmul.mubr.bf16.gmra.mrb[0].mxu0 %v1088
      %v1123 = vpop.f32.mrb[0].mxu0
      %v1124 = vadd.f32 %v509, %v1123
      %v1125 = vpop.f32.mrb[0].mxu0
      %v1126 = vadd.f32 %v513, %v1125
      %v1127 = vpop.f32.mrb[0].mxu0
      %v1128 = vadd.f32 %v509, %v1127
      %v1129 = vpop.f32.mrb[0].mxu0
      %v1130 = vadd.f32 %v513, %v1129
      %1131 = vdwg.mxu0
      %1132 = vmatprep.subr.bf16.mxu0 0
      %1133 = vmatpush1.bf16.msra.mxu0 %v603
      %1134 = vmatprep.subr.bf16.mxu0 0
      %1135 = vmatpush1.bf16.msra.mxu0 %v606
      %1136 = vmatprep.subr.bf16.mxu0 0
      %1137 = vmatpush1.bf16.msra.mxu0 %v609
      %1138 = vmatprep.subr.bf16.mxu0 0
      %1139 = vmatpush1.bf16.msra.mxu0 %v612
      %1140 = vmatprep.subr.bf16.mxu0 0
      %1141 = vmatpush1.bf16.msra.mxu0 %v615
      %1142 = vmatprep.subr.bf16.mxu0 0
      %1143 = vmatpush1.bf16.msra.mxu0 %v618
      %1144 = vmatprep.subr.bf16.mxu0 0
      %1145 = vmatpush1.bf16.msra.mxu0 %v621
      %1146 = vmatprep.subr.bf16.mxu0 0
      %1147 = vmatpush1.bf16.msra.mxu0 %v624
      %1148 = vmatprep.subr.bf16.mxu0 0
      %1149 = vmatpush1.bf16.msra.mxu0 0
      %1150 = vmatprep.subr.bf16.mxu0 0
      %1151 = vmatpush1.bf16.msra.mxu0 0
      %1152 = vmatprep.subr.bf16.mxu0 0
      %1153 = vmatpush1.bf16.msra.mxu0 0
      %1154 = vmatprep.subr.bf16.mxu0 0
      %1155 = vmatpush1.bf16.msra.mxu0 0
      %1156 = vmatprep.subr.bf16.mxu0 0
      %1157 = vmatpush1.bf16.msra.mxu0 0
      %1158 = vmatprep.subr.bf16.mxu0 0
      %1159 = vmatpush1.bf16.msra.mxu0 0
      %1160 = vmatprep.subr.bf16.mxu0 0
      %1161 = vmatpush1.bf16.msra.mxu0 0
      %1162 = vmatprep.subr.bf16.mxu0 0
      %1163 = vmatpush1.bf16.msra.mxu0 0
      %1164 = vmatprep.mubr.bf16.mxu0 0
      %1165 = vmatmul.mubr.bf16.gmra.mrb[0].mxu0 %v1088
      %v1166 = vpop.f32.mrb[0].mxu0
      %v1167 = vadd.f32 %v517, %v1166
      %v1168 = vpop.f32.mrb[0].mxu0
      %v1169 = vpop.f32.mrb[0].mxu0
      %v1170 = vadd.f32 %v517, %v1169
      %v1171 = vpop.f32.mrb[0].mxu0
      %1172 = vdwg.mxu0
      %v1173 = vadd.f32 %v1082, %v1124
      %v1174 = vadd.f32 %v1085, %v1128
      %v1175 = vmul.f32 %v1173, 0.5
      %v1176 = vmul.f32 %v1174, 0.5
      %v1177 = vtanh.pop %v1175
      %v1178 = vtanh.pop %v1176
      %v1179 = vadd.f32 %v1177, 1.0
      %v1180 = vadd.f32 %v1178, 1.0
      %v1181 = vmul.f32 %v1179, 0.5
      %v1182 = vmul.f32 %v1180, 0.5
      %v1183 = vadd.f32 %v1083, %v1126
      %v1184 = vadd.f32 %v1086, %v1130
      %v1185 = vmul.f32 %v1183, 0.5
      %v1186 = vmul.f32 %v1184, 0.5
      %v1187 = vtanh.pop %v1185
      %v1188 = vtanh.pop %v1186
      %v1189 = vadd.f32 %v1187, 1.0
      %v1190 = vadd.f32 %v1188, 1.0
      %v1191 = vmul.f32 %v1189, 0.5
      %v1192 = vmul.f32 %v1190, 0.5
      %v1193 = vmul.f32 %v1181, %v1167
      %v1194 = vmul.f32 %v1182, %v1170
      %v1195 = vadd.f32 %v1084, %v1193
      %v1196 = vadd.f32 %v1087, %v1194
      %v1197 = vtanh.pop %v1195
      %v1198 = vtanh.pop %v1196
      %v1199 = vsub.f32 1.0, %v1191
      %v1200 = vsub.f32 1.0, %v1192
      %v1201 = vmul.f32 %v1199, %v1197
      %v1202 = vmul.f32 %v1200, %v1198
      %v1203 = vmul.f32 %v1191, %v1074
      %v1204 = vmul.f32 %v1192, %v1075
      %v1205 = vadd.f32 %v1201, %v1203
      %v1206 = vadd.f32 %v1202, %v1204
      %s1207 = sadd.s32 %s53, 3
      %v1208 = vstv %s1207
      %vm1209 = vcmp.lt.s32.totalorder %v1208, %v455
      %vm1210 = vcmp.lt.s32.totalorder %v1208, %v456
      %v1211 = vsel %vm1209, 1, 0
      %v1212 = vsel %vm1210, 1, 0
      %1213 = vset.pattern.permute.xlu0 0
      %1214 = vperm.xlu0 %1213, %v1211
      %v1215 = vpop.permute.xlu0 %1214
      %1216 = vset.pattern.permute.xlu0 0
      %1217 = vperm.xlu0 %1216, %v1212
      %v1218 = vpop.permute.xlu0 %1217
      %vm1219 = vcmp.eq.s32.totalorder %v1215, 1
      %vm1220 = vcmp.eq.s32.totalorder %v1218, 1
      %v1221 = vsel %vm1219, %v1205, %v1074
      %v1222 = vsel %vm1220, %v1206, %v1075
      %s1223 = smul.u32 4, 3
      %s1224 = smul.addr %s1223, 8
      %s1225 = scalar_lea.vmem [#allocation2], %s1224
      %v1226 = vld [vmem:[%s1225] sm:$0xff]
      %v1227 = vld [vmem:[%s1225 + $0x8] sm:$0xff]
      %v1228 = vld [vmem:[%s1225 + $0x10] sm:$0xff]
      %v1229 = vunpack.c.l.bf16 %v1226
      %v1230 = vunpack.c.l.bf16 %v1227
      %v1231 = vunpack.c.l.bf16 %v1228
      %v1232 = vunpack.c.h.bf16 %v1226
      %v1233 = vunpack.c.h.bf16 %v1227
      %v1234 = vunpack.c.h.bf16 %v1228
      %v1235 = vpack.c.bf16 %v1222, %v1221
      %1236 = vmatprep.subr.bf16.mxu0 %v602
      %1237 = vmatpush1.bf16.msra.mxu0 %v601
      %1238 = vmatprep.subr.bf16.mxu0 %v605
      %1239 = vmatpush1.bf16.msra.mxu0 %v604
      %1240 = vmatprep.subr.bf16.mxu0 %v608
      %1241 = vmatpush1.bf16.msra.mxu0 %v607
      %1242 = vmatprep.subr.bf16.mxu0 %v611
      %1243 = vmatpush1.bf16.msra.mxu0 %v610
      %1244 = vmatprep.subr.bf16.mxu0 %v614
      %1245 = vmatpush1.bf16.msra.mxu0 %v613
      %1246 = vmatprep.subr.bf16.mxu0 %v617
      %1247 = vmatpush1.bf16.msra.mxu0 %v616
      %1248 = vmatprep.subr.bf16.mxu0 %v620
      %1249 = vmatpush1.bf16.msra.mxu0 %v619
      %1250 = vmatprep.subr.bf16.mxu0 %v623
      %1251 = vmatpush1.bf16.msra.mxu0 %v622
      %1252 = vmatprep.subr.bf16.mxu0 0
      %1253 = vmatpush1.bf16.msra.mxu0 0
      %1254 = vmatprep.subr.bf16.mxu0 0
      %1255 = vmatpush1.bf16.msra.mxu0 0
      %1256 = vmatprep.subr.bf16.mxu0 0
      %1257 = vmatpush1.bf16.msra.mxu0 0
      %1258 = vmatprep.subr.bf16.mxu0 0
      %1259 = vmatpush1.bf16.msra.mxu0 0
      %1260 = vmatprep.subr.bf16.mxu0 0
      %1261 = vmatpush1.bf16.msra.mxu0 0
      %1262 = vmatprep.subr.bf16.mxu0 0
      %1263 = vmatpush1.bf16.msra.mxu0 0
      %1264 = vmatprep.subr.bf16.mxu0 0
      %1265 = vmatpush1.bf16.msra.mxu0 0
      %1266 = vmatprep.subr.bf16.mxu0 0
      %1267 = vmatpush1.bf16.msra.mxu0 0
      %1268 = vmatprep.mubr.bf16.mxu0 0
      %1269 = vmatmul.mubr.bf16.gmra.mrb[0].mxu0 %v1235
      %v1270 = vpop.f32.mrb[0].mxu0
      %v1271 = vadd.f32 %v509, %v1270
      %v1272 = vpop.f32.mrb[0].mxu0
      %v1273 = vadd.f32 %v513, %v1272
      %v1274 = vpop.f32.mrb[0].mxu0
      %v1275 = vadd.f32 %v509, %v1274
      %v1276 = vpop.f32.mrb[0].mxu0
      %v1277 = vadd.f32 %v513, %v1276
      %1278 = vdwg.mxu0
      %1279 = vmatprep.subr.bf16.mxu0 0
      %1280 = vmatpush1.bf16.msra.mxu0 %v603
      %1281 = vmatprep.subr.bf16.mxu0 0
      %1282 = vmatpush1.bf16.msra.mxu0 %v606
      %1283 = vmatprep.subr.bf16.mxu0 0
      %1284 = vmatpush1.bf16.msra.mxu0 %v609
      %1285 = vmatprep.subr.bf16.mxu0 0
      %1286 = vmatpush1.bf16.msra.mxu0 %v612
      %1287 = vmatprep.subr.bf16.mxu0 0
      %1288 = vmatpush1.bf16.msra.mxu0 %v615
      %1289 = vmatprep.subr.bf16.mxu0 0
      %1290 = vmatpush1.bf16.msra.mxu0 %v618
      %1291 = vmatprep.subr.bf16.mxu0 0
      %1292 = vmatpush1.bf16.msra.mxu0 %v621
      %1293 = vmatprep.subr.bf16.mxu0 0
      %1294 = vmatpush1.bf16.msra.mxu0 %v624
      %1295 = vmatprep.subr.bf16.mxu0 0
      %1296 = vmatpush1.bf16.msra.mxu0 0
      %1297 = vmatprep.subr.bf16.mxu0 0
      %1298 = vmatpush1.bf16.msra.mxu0 0
      %1299 = vmatprep.subr.bf16.mxu0 0
      %1300 = vmatpush1.bf16.msra.mxu0 0
      %1301 = vmatprep.subr.bf16.mxu0 0
      %1302 = vmatpush1.bf16.msra.mxu0 0
      %1303 = vmatprep.subr.bf16.mxu0 0
      %1304 = vmatpush1.bf16.msra.mxu0 0
      %1305 = vmatprep.subr.bf16.mxu0 0
      %1306 = vmatpush1.bf16.msra.mxu0 0
      %1307 = vmatprep.subr.bf16.mxu0 0
      %1308 = vmatpush1.bf16.msra.mxu0 0
      %1309 = vmatprep.subr.bf16.mxu0 0
      %1310 = vmatpush1.bf16.msra.mxu0 0
      %1311 = vmatprep.mubr.bf16.mxu0 0
      %1312 = vmatmul.mubr.bf16.gmra.mrb[0].mxu0 %v1235
      %v1313 = vpop.f32.mrb[0].mxu0
      %v1314 = vadd.f32 %v517, %v1313
      %v1315 = vpop.f32.mrb[0].mxu0
      %v1316 = vpop.f32.mrb[0].mxu0
      %v1317 = vadd.f32 %v517, %v1316
      %v1318 = vpop.f32.mrb[0].mxu0
      %1319 = vdwg.mxu0
      %v1320 = vadd.f32 %v1229, %v1271
      %v1321 = vadd.f32 %v1232, %v1275
      %v1322 = vmul.f32 %v1320, 0.5
      %v1323 = vmul.f32 %v1321, 0.5
      %v1324 = vtanh.pop %v1322
      %v1325 = vtanh.pop %v1323
      %v1326 = vadd.f32 %v1324, 1.0
      %v1327 = vadd.f32 %v1325, 1.0
      %v1328 = vmul.f32 %v1326, 0.5
      %v1329 = vmul.f32 %v1327, 0.5
      %v1330 = vadd.f32 %v1230, %v1273
      %v1331 = vadd.f32 %v1233, %v1277
      %v1332 = vmul.f32 %v1330, 0.5
      %v1333 = vmul.f32 %v1331, 0.5
      %v1334 = vtanh.pop %v1332
      %v1335 = vtanh.pop %v1333
      %v1336 = vadd.f32 %v1334, 1.0
      %v1337 = vadd.f32 %v1335, 1.0
      %v1338 = vmul.f32 %v1336, 0.5
      %v1339 = vmul.f32 %v1337, 0.5
      %v1340 = vmul.f32 %v1328, %v1314
      %v1341 = vmul.f32 %v1329, %v1317
      %v1342 = vadd.f32 %v1231, %v1340
      %v1343 = vadd.f32 %v1234, %v1341
      %v1344 = vtanh.pop %v1342
      %v1345 = vtanh.pop %v1343
      %v1346 = vsub.f32 1.0, %v1338
      %v1347 = vsub.f32 1.0, %v1339
      %v1348 = vmul.f32 %v1346, %v1344
      %v1349 = vmul.f32 %v1347, %v1345
      %v1350 = vmul.f32 %v1338, %v1221
      %v1351 = vmul.f32 %v1339, %v1222
      %v1352 = vadd.f32 %v1348, %v1350
      %v1353 = vadd.f32 %v1349, %v1351
      %s1354 = sadd.s32 %s53, 4
      %v1355 = vstv %s1354
      %vm1356 = vcmp.lt.s32.totalorder %v1355, %v455
      %vm1357 = vcmp.lt.s32.totalorder %v1355, %v456
      %v1358 = vsel %vm1356, 1, 0
      %v1359 = vsel %vm1357, 1, 0
      %1360 = vset.pattern.permute.xlu0 0
      %1361 = vperm.xlu0 %1360, %v1358
      %v1362 = vpop.permute.xlu0 %1361
      %1363 = vset.pattern.permute.xlu0 0
      %1364 = vperm.xlu0 %1363, %v1359
      %v1365 = vpop.permute.xlu0 %1364
      %vm1366 = vcmp.eq.s32.totalorder %v1362, 1
      %vm1367 = vcmp.eq.s32.totalorder %v1365, 1
      %v1368 = vsel %vm1366, %v1352, %v1221
      %v1369 = vsel %vm1367, %v1353, %v1222
      %s1370 = smul.u32 5, 3
      %s1371 = smul.addr %s1370, 8
      %s1372 = scalar_lea.vmem [#allocation2], %s1371
      %v1373 = vld [vmem:[%s1372] sm:$0xff]
      %v1374 = vld [vmem:[%s1372 + $0x8] sm:$0xff]
      %v1375 = vld [vmem:[%s1372 + $0x10] sm:$0xff]
      %v1376 = vunpack.c.l.bf16 %v1373
      %v1377 = vunpack.c.l.bf16 %v1374
      %v1378 = vunpack.c.l.bf16 %v1375
      %v1379 = vunpack.c.h.bf16 %v1373
      %v1380 = vunpack.c.h.bf16 %v1374
      %v1381 = vunpack.c.h.bf16 %v1375
      %v1382 = vpack.c.bf16 %v1369, %v1368
      %1383 = vmatprep.subr.bf16.mxu0 %v602
      %1384 = vmatpush1.bf16.msra.mxu0 %v601
      %1385 = vmatprep.subr.bf16.mxu0 %v605
      %1386 = vmatpush1.bf16.msra.mxu0 %v604
      %1387 = vmatprep.subr.bf16.mxu0 %v608
      %1388 = vmatpush1.bf16.msra.mxu0 %v607
      %1389 = vmatprep.subr.bf16.mxu0 %v611
      %1390 = vmatpush1.bf16.msra.mxu0 %v610
      %1391 = vmatprep.subr.bf16.mxu0 %v614
      %1392 = vmatpush1.bf16.msra.mxu0 %v613
      %1393 = vmatprep.subr.bf16.mxu0 %v617
      %1394 = vmatpush1.bf16.msra.mxu0 %v616
      %1395 = vmatprep.subr.bf16.mxu0 %v620
      %1396 = vmatpush1.bf16.msra.mxu0 %v619
      %1397 = vmatprep.subr.bf16.mxu0 %v623
      %1398 = vmatpush1.bf16.msra.mxu0 %v622
      %1399 = vmatprep.subr.bf16.mxu0 0
      %1400 = vmatpush1.bf16.msra.mxu0 0
      %1401 = vmatprep.subr.bf16.mxu0 0
      %1402 = vmatpush1.bf16.msra.mxu0 0
      %1403 = vmatprep.subr.bf16.mxu0 0
      %1404 = vmatpush1.bf16.msra.mxu0 0
      %1405 = vmatprep.subr.bf16.mxu0 0
      %1406 = vmatpush1.bf16.msra.mxu0 0
      %1407 = vmatprep.subr.bf16.mxu0 0
      %1408 = vmatpush1.bf16.msra.mxu0 0
      %1409 = vmatprep.subr.bf16.mxu0 0
      %1410 = vmatpush1.bf16.msra.mxu0 0
      %1411 = vmatprep.subr.bf16.mxu0 0
      %1412 = vmatpush1.bf16.msra.mxu0 0
      %1413 = vmatprep.subr.bf16.mxu0 0
      %1414 = vmatpush1.bf16.msra.mxu0 0
      %1415 = vmatprep.mubr.bf16.mxu0 0
      %1416 = vmatmul.mubr.bf16.gmra.mrb[0].mxu0 %v1382
      %v1417 = vpop.f32.mrb[0].mxu0
      %v1418 = vadd.f32 %v509, %v1417
      %v1419 = vpop.f32.mrb[0].mxu0
      %v1420 = vadd.f32 %v513, %v1419
      %v1421 = vpop.f32.mrb[0].mxu0
      %v1422 = vadd.f32 %v509, %v1421
      %v1423 = vpop.f32.mrb[0].mxu0
      %v1424 = vadd.f32 %v513, %v1423
      %1425 = vdwg.mxu0
      %1426 = vmatprep.subr.bf16.mxu0 0
      %1427 = vmatpush1.bf16.msra.mxu0 %v603
      %1428 = vmatprep.subr.bf16.mxu0 0
      %1429 = vmatpush1.bf16.msra.mxu0 %v606
      %1430 = vmatprep.subr.bf16.mxu0 0
      %1431 = vmatpush1.bf16.msra.mxu0 %v609
      %1432 = vmatprep.subr.bf16.mxu0 0
      %1433 = vmatpush1.bf16.msra.mxu0 %v612
      %1434 = vmatprep.subr.bf16.mxu0 0
      %1435 = vmatpush1.bf16.msra.mxu0 %v615
      %1436 = vmatprep.subr.bf16.mxu0 0
      %1437 = vmatpush1.bf16.msra.mxu0 %v618
      %1438 = vmatprep.subr.bf16.mxu0 0
      %1439 = vmatpush1.bf16.msra.mxu0 %v621
      %1440 = vmatprep.subr.bf16.mxu0 0
      %1441 = vmatpush1.bf16.msra.mxu0 %v624
      %1442 = vmatprep.subr.bf16.mxu0 0
      %1443 = vmatpush1.bf16.msra.mxu0 0
      %1444 = vmatprep.subr.bf16.mxu0 0
      %1445 = vmatpush1.bf16.msra.mxu0 0
      %1446 = vmatprep.subr.bf16.mxu0 0
      %1447 = vmatpush1.bf16.msra.mxu0 0
      %1448 = vmatprep.subr.bf16.mxu0 0
      %1449 = vmatpush1.bf16.msra.mxu0 0
      %1450 = vmatprep.subr.bf16.mxu0 0
      %1451 = vmatpush1.bf16.msra.mxu0 0
      %1452 = vmatprep.subr.bf16.mxu0 0
      %1453 = vmatpush1.bf16.msra.mxu0 0
      %1454 = vmatprep.subr.bf16.mxu0 0
      %1455 = vmatpush1.bf16.msra.mxu0 0
      %1456 = vmatprep.subr.bf16.mxu0 0
      %1457 = vmatpush1.bf16.msra.mxu0 0
      %1458 = vmatprep.mubr.bf16.mxu0 0
      %1459 = vmatmul.mubr.bf16.gmra.mrb[0].mxu0 %v1382
      %v1460 = vpop.f32.mrb[0].mxu0
      %v1461 = vadd.f32 %v517, %v1460
      %v1462 = vpop.f32.mrb[0].mxu0
      %v1463 = vpop.f32.mrb[0].mxu0
      %v1464 = vadd.f32 %v517, %v1463
      %v1465 = vpop.f32.mrb[0].mxu0
      %1466 = vdwg.mxu0
      %v1467 = vadd.f32 %v1376, %v1418
      %v1468 = vadd.f32 %v1379, %v1422
      %v1469 = vmul.f32 %v1467, 0.5
      %v1470 = vmul.f32 %v1468, 0.5
      %v1471 = vtanh.pop %v1469
      %v1472 = vtanh.pop %v1470
      %v1473 = vadd.f32 %v1471, 1.0
      %v1474 = vadd.f32 %v1472, 1.0
      %v1475 = vmul.f32 %v1473, 0.5
      %v1476 = vmul.f32 %v1474, 0.5
      %v1477 = vadd.f32 %v1377, %v1420
      %v1478 = vadd.f32 %v1380, %v1424
      %v1479 = vmul.f32 %v1477, 0.5
      %v1480 = vmul.f32 %v1478, 0.5
      %v1481 = vtanh.pop %v1479
      %v1482 = vtanh.pop %v1480
      %v1483 = vadd.f32 %v1481, 1.0
      %v1484 = vadd.f32 %v1482, 1.0
      %v1485 = vmul.f32 %v1483, 0.5
      %v1486 = vmul.f32 %v1484, 0.5
      %v1487 = vmul.f32 %v1475, %v1461
      %v1488 = vmul.f32 %v1476, %v1464
      %v1489 = vadd.f32 %v1378, %v1487
      %v1490 = vadd.f32 %v1381, %v1488
      %v1491 = vtanh.pop %v1489
      %v1492 = vtanh.pop %v1490
      %v1493 = vsub.f32 1.0, %v1485
      %v1494 = vsub.f32 1.0, %v1486
      %v1495 = vmul.f32 %v1493, %v1491
      %v1496 = vmul.f32 %v1494, %v1492
      %v1497 = vmul.f32 %v1485, %v1368
      %v1498 = vmul.f32 %v1486, %v1369
      %v1499 = vadd.f32 %v1495, %v1497
      %v1500 = vadd.f32 %v1496, %v1498
      %s1501 = sadd.s32 %s53, 5
      %v1502 = vstv %s1501
      %vm1503 = vcmp.lt.s32.totalorder %v1502, %v455
      %vm1504 = vcmp.lt.s32.totalorder %v1502, %v456
      %v1505 = vsel %vm1503, 1, 0
      %v1506 = vsel %vm1504, 1, 0
      %1507 = vset.pattern.permute.xlu0 0
      %1508 = vperm.xlu0 %1507, %v1505
      %v1509 = vpop.permute.xlu0 %1508
      %1510 = vset.pattern.permute.xlu0 0
      %1511 = vperm.xlu0 %1510, %v1506
      %v1512 = vpop.permute.xlu0 %1511
      %vm1513 = vcmp.eq.s32.totalorder %v1509, 1
      %vm1514 = vcmp.eq.s32.totalorder %v1512, 1
      %v1515 = vsel %vm1513, %v1499, %v1368
      %v1516 = vsel %vm1514, %v1500, %v1369
      %s1517 = smul.u32 6, 3
      %s1518 = smul.addr %s1517, 8
      %s1519 = scalar_lea.vmem [#allocation2], %s1518
      %v1520 = vld [vmem:[%s1519] sm:$0xff]
      %v1521 = vld [vmem:[%s1519 + $0x8] sm:$0xff]
      %v1522 = vld [vmem:[%s1519 + $0x10] sm:$0xff]
      %v1523 = vunpack.c.l.bf16 %v1520
      %v1524 = vunpack.c.l.bf16 %v1521
      %v1525 = vunpack.c.l.bf16 %v1522
      %v1526 = vunpack.c.h.bf16 %v1520
      %v1527 = vunpack.c.h.bf16 %v1521
      %v1528 = vunpack.c.h.bf16 %v1522
      %v1529 = vpack.c.bf16 %v1516, %v1515
      %1530 = vmatprep.subr.bf16.mxu0 %v602
      %1531 = vmatpush1.bf16.msra.mxu0 %v601
      %1532 = vmatprep.subr.bf16.mxu0 %v605
      %1533 = vmatpush1.bf16.msra.mxu0 %v604
      %1534 = vmatprep.subr.bf16.mxu0 %v608
      %1535 = vmatpush1.bf16.msra.mxu0 %v607
      %1536 = vmatprep.subr.bf16.mxu0 %v611
      %1537 = vmatpush1.bf16.msra.mxu0 %v610
      %1538 = vmatprep.subr.bf16.mxu0 %v614
      %1539 = vmatpush1.bf16.msra.mxu0 %v613
      %1540 = vmatprep.subr.bf16.mxu0 %v617
      %1541 = vmatpush1.bf16.msra.mxu0 %v616
      %1542 = vmatprep.subr.bf16.mxu0 %v620
      %1543 = vmatpush1.bf16.msra.mxu0 %v619
      %1544 = vmatprep.subr.bf16.mxu0 %v623
      %1545 = vmatpush1.bf16.msra.mxu0 %v622
      %1546 = vmatprep.subr.bf16.mxu0 0
      %1547 = vmatpush1.bf16.msra.mxu0 0
      %1548 = vmatprep.subr.bf16.mxu0 0
      %1549 = vmatpush1.bf16.msra.mxu0 0
      %1550 = vmatprep.subr.bf16.mxu0 0
      %1551 = vmatpush1.bf16.msra.mxu0 0
      %1552 = vmatprep.subr.bf16.mxu0 0
      %1553 = vmatpush1.bf16.msra.mxu0 0
      %1554 = vmatprep.subr.bf16.mxu0 0
      %1555 = vmatpush1.bf16.msra.mxu0 0
      %1556 = vmatprep.subr.bf16.mxu0 0
      %1557 = vmatpush1.bf16.msra.mxu0 0
      %1558 = vmatprep.subr.bf16.mxu0 0
      %1559 = vmatpush1.bf16.msra.mxu0 0
      %1560 = vmatprep.subr.bf16.mxu0 0
      %1561 = vmatpush1.bf16.msra.mxu0 0
      %1562 = vmatprep.mubr.bf16.mxu0 0
      %1563 = vmatmul.mubr.bf16.gmra.mrb[0].mxu0 %v1529
      %v1564 = vpop.f32.mrb[0].mxu0
      %v1565 = vadd.f32 %v509, %v1564
      %v1566 = vpop.f32.mrb[0].mxu0
      %v1567 = vadd.f32 %v513, %v1566
      %v1568 = vpop.f32.mrb[0].mxu0
      %v1569 = vadd.f32 %v509, %v1568
      %v1570 = vpop.f32.mrb[0].mxu0
      %v1571 = vadd.f32 %v513, %v1570
      %1572 = vdwg.mxu0
      %1573 = vmatprep.subr.bf16.mxu0 0
      %1574 = vmatpush1.bf16.msra.mxu0 %v603
      %1575 = vmatprep.subr.bf16.mxu0 0
      %1576 = vmatpush1.bf16.msra.mxu0 %v606
      %1577 = vmatprep.subr.bf16.mxu0 0
      %1578 = vmatpush1.bf16.msra.mxu0 %v609
      %1579 = vmatprep.subr.bf16.mxu0 0
      %1580 = vmatpush1.bf16.msra.mxu0 %v612
      %1581 = vmatprep.subr.bf16.mxu0 0
      %1582 = vmatpush1.bf16.msra.mxu0 %v615
      %1583 = vmatprep.subr.bf16.mxu0 0
      %1584 = vmatpush1.bf16.msra.mxu0 %v618
      %1585 = vmatprep.subr.bf16.mxu0 0
      %1586 = vmatpush1.bf16.msra.mxu0 %v621
      %1587 = vmatprep.subr.bf16.mxu0 0
      %1588 = vmatpush1.bf16.msra.mxu0 %v624
      %1589 = vmatprep.subr.bf16.mxu0 0
      %1590 = vmatpush1.bf16.msra.mxu0 0
      %1591 = vmatprep.subr.bf16.mxu0 0
      %1592 = vmatpush1.bf16.msra.mxu0 0
      %1593 = vmatprep.subr.bf16.mxu0 0
      %1594 = vmatpush1.bf16.msra.mxu0 0
      %1595 = vmatprep.subr.bf16.mxu0 0
      %1596 = vmatpush1.bf16.msra.mxu0 0
      %1597 = vmatprep.subr.bf16.mxu0 0
      %1598 = vmatpush1.bf16.msra.mxu0 0
      %1599 = vmatprep.subr.bf16.mxu0 0
      %1600 = vmatpush1.bf16.msra.mxu0 0
      %1601 = vmatprep.subr.bf16.mxu0 0
      %1602 = vmatpush1.bf16.msra.mxu0 0
      %1603 = vmatprep.subr.bf16.mxu0 0
      %1604 = vmatpush1.bf16.msra.mxu0 0
      %1605 = vmatprep.mubr.bf16.mxu0 0
      %1606 = vmatmul.mubr.bf16.gmra.mrb[0].mxu0 %v1529
      %v1607 = vpop.f32.mrb[0].mxu0
      %v1608 = vadd.f32 %v517, %v1607
      %v1609 = vpop.f32.mrb[0].mxu0
      %v1610 = vpop.f32.mrb[0].mxu0
      %v1611 = vadd.f32 %v517, %v1610
      %v1612 = vpop.f32.mrb[0].mxu0
      %1613 = vdwg.mxu0
      %v1614 = vadd.f32 %v1523, %v1565
      %v1615 = vadd.f32 %v1526, %v1569
      %v1616 = vmul.f32 %v1614, 0.5
      %v1617 = vmul.f32 %v1615, 0.5
      %v1618 = vtanh.pop %v1616
      %v1619 = vtanh.pop %v1617
      %v1620 = vadd.f32 %v1618, 1.0
      %v1621 = vadd.f32 %v1619, 1.0
      %v1622 = vmul.f32 %v1620, 0.5
      %v1623 = vmul.f32 %v1621, 0.5
      %v1624 = vadd.f32 %v1524, %v1567
      %v1625 = vadd.f32 %v1527, %v1571
      %v1626 = vmul.f32 %v1624, 0.5
      %v1627 = vmul.f32 %v1625, 0.5
      %v1628 = vtanh.pop %v1626
      %v1629 = vtanh.pop %v1627
      %v1630 = vadd.f32 %v1628, 1.0
      %v1631 = vadd.f32 %v1629, 1.0
      %v1632 = vmul.f32 %v1630, 0.5
      %v1633 = vmul.f32 %v1631, 0.5
      %v1634 = vmul.f32 %v1622, %v1608
      %v1635 = vmul.f32 %v1623, %v1611
      %v1636 = vadd.f32 %v1525, %v1634
      %v1637 = vadd.f32 %v1528, %v1635
      %v1638 = vtanh.pop %v1636
      %v1639 = vtanh.pop %v1637
      %v1640 = vsub.f32 1.0, %v1632
      %v1641 = vsub.f32 1.0, %v1633
      %v1642 = vmul.f32 %v1640, %v1638
      %v1643 = vmul.f32 %v1641, %v1639
      %v1644 = vmul.f32 %v1632, %v1515
      %v1645 = vmul.f32 %v1633, %v1516
      %v1646 = vadd.f32 %v1642, %v1644
      %v1647 = vadd.f32 %v1643, %v1645
      %s1648 = sadd.s32 %s53, 6
      %v1649 = vstv %s1648
      %vm1650 = vcmp.lt.s32.totalorder %v1649, %v455
      %vm1651 = vcmp.lt.s32.totalorder %v1649, %v456
      %v1652 = vsel %vm1650, 1, 0
      %v1653 = vsel %vm1651, 1, 0
      %1654 = vset.pattern.permute.xlu0 0
      %1655 = vperm.xlu0 %1654, %v1652
      %v1656 = vpop.permute.xlu0 %1655
      %1657 = vset.pattern.permute.xlu0 0
      %1658 = vperm.xlu0 %1657, %v1653
      %v1659 = vpop.permute.xlu0 %1658
      %vm1660 = vcmp.eq.s32.totalorder %v1656, 1
      %vm1661 = vcmp.eq.s32.totalorder %v1659, 1
      %v1662 = vsel %vm1660, %v1646, %v1515
      %v1663 = vsel %vm1661, %v1647, %v1516
      %s1664 = smul.u32 7, 3
      %s1665 = smul.addr %s1664, 8
      %s1666 = scalar_lea.vmem [#allocation2], %s1665
      %v1667 = vld [vmem:[%s1666] sm:$0xff]
      %v1668 = vld [vmem:[%s1666 + $0x8] sm:$0xff]
      %v1669 = vld [vmem:[%s1666 + $0x10] sm:$0xff]
      %v1670 = vunpack.c.l.bf16 %v1667
      %v1671 = vunpack.c.l.bf16 %v1668
      %v1672 = vunpack.c.l.bf16 %v1669
      %v1673 = vunpack.c.h.bf16 %v1667
      %v1674 = vunpack.c.h.bf16 %v1668
      %v1675 = vunpack.c.h.bf16 %v1669
      %v1676 = vpack.c.bf16 %v1663, %v1662
      %1677 = vmatprep.subr.bf16.mxu0 %v602
      %1678 = vmatpush1.bf16.msra.mxu0 %v601
      %1679 = vmatprep.subr.bf16.mxu0 %v605
      %1680 = vmatpush1.bf16.msra.mxu0 %v604
      %1681 = vmatprep.subr.bf16.mxu0 %v608
      %1682 = vmatpush1.bf16.msra.mxu0 %v607
      %1683 = vmatprep.subr.bf16.mxu0 %v611
      %1684 = vmatpush1.bf16.msra.mxu0 %v610
      %1685 = vmatprep.subr.bf16.mxu0 %v614
      %1686 = vmatpush1.bf16.msra.mxu0 %v613
      %1687 = vmatprep.subr.bf16.mxu0 %v617
      %1688 = vmatpush1.bf16.msra.mxu0 %v616
      %1689 = vmatprep.subr.bf16.mxu0 %v620
      %1690 = vmatpush1.bf16.msra.mxu0 %v619
      %1691 = vmatprep.subr.bf16.mxu0 %v623
      %1692 = vmatpush1.bf16.msra.mxu0 %v622
      %1693 = vmatprep.subr.bf16.mxu0 0
      %1694 = vmatpush1.bf16.msra.mxu0 0
      %1695 = vmatprep.subr.bf16.mxu0 0
      %1696 = vmatpush1.bf16.msra.mxu0 0
      %1697 = vmatprep.subr.bf16.mxu0 0
      %1698 = vmatpush1.bf16.msra.mxu0 0
      %1699 = vmatprep.subr.bf16.mxu0 0
      %1700 = vmatpush1.bf16.msra.mxu0 0
      %1701 = vmatprep.subr.bf16.mxu0 0
      %1702 = vmatpush1.bf16.msra.mxu0 0
      %1703 = vmatprep.subr.bf16.mxu0 0
      %1704 = vmatpush1.bf16.msra.mxu0 0
      %1705 = vmatprep.subr.bf16.mxu0 0
      %1706 = vmatpush1.bf16.msra.mxu0 0
      %1707 = vmatprep.subr.bf16.mxu0 0
      %1708 = vmatpush1.bf16.msra.mxu0 0
      %1709 = vmatprep.mubr.bf16.mxu0 0
      %1710 = vmatmul.mubr.bf16.gmra.mrb[0].mxu0 %v1676
      %v1711 = vpop.f32.mrb[0].mxu0
      %v1712 = vadd.f32 %v509, %v1711
      %v1713 = vpop.f32.mrb[0].mxu0
      %v1714 = vadd.f32 %v513, %v1713
      %v1715 = vpop.f32.mrb[0].mxu0
      %v1716 = vadd.f32 %v509, %v1715
      %v1717 = vpop.f32.mrb[0].mxu0
      %v1718 = vadd.f32 %v513, %v1717
      %1719 = vdwg.mxu0
      %1720 = vmatprep.subr.bf16.mxu0 0
      %1721 = vmatpush1.bf16.msra.mxu0 %v603
      %1722 = vmatprep.subr.bf16.mxu0 0
      %1723 = vmatpush1.bf16.msra.mxu0 %v606
      %1724 = vmatprep.subr.bf16.mxu0 0
      %1725 = vmatpush1.bf16.msra.mxu0 %v609
      %1726 = vmatprep.subr.bf16.mxu0 0
      %1727 = vmatpush1.bf16.msra.mxu0 %v612
      %1728 = vmatprep.subr.bf16.mxu0 0
      %1729 = vmatpush1.bf16.msra.mxu0 %v615
      %1730 = vmatprep.subr.bf16.mxu0 0
      %1731 = vmatpush1.bf16.msra.mxu0 %v618
      %1732 = vmatprep.subr.bf16.mxu0 0
      %1733 = vmatpush1.bf16.msra.mxu0 %v621
      %1734 = vmatprep.subr.bf16.mxu0 0
      %1735 = vmatpush1.bf16.msra.mxu0 %v624
      %1736 = vmatprep.subr.bf16.mxu0 0
      %1737 = vmatpush1.bf16.msra.mxu0 0
      %1738 = vmatprep.subr.bf16.mxu0 0
      %1739 = vmatpush1.bf16.msra.mxu0 0
      %1740 = vmatprep.subr.bf16.mxu0 0
      %1741 = vmatpush1.bf16.msra.mxu0 0
      %1742 = vmatprep.subr.bf16.mxu0 0
      %1743 = vmatpush1.bf16.msra.mxu0 0
      %1744 = vmatprep.subr.bf16.mxu0 0
      %1745 = vmatpush1.bf16.msra.mxu0 0
      %1746 = vmatprep.subr.bf16.mxu0 0
      %1747 = vmatpush1.bf16.msra.mxu0 0
      %1748 = vmatprep.subr.bf16.mxu0 0
      %1749 = vmatpush1.bf16.msra.mxu0 0
      %1750 = vmatprep.subr.bf16.mxu0 0
      %1751 = vmatpush1.bf16.msra.mxu0 0
      %1752 = vmatprep.mubr.bf16.mxu0 0
      %1753 = vmatmul.mubr.bf16.gmra.mrb[0].mxu0 %v1676
      %v1754 = vpop.f32.mrb[0].mxu0
      %v1755 = vadd.f32 %v517, %v1754
      %v1756 = vpop.f32.mrb[0].mxu0
      %v1757 = vpop.f32.mrb[0].mxu0
      %v1758 = vadd.f32 %v517, %v1757
      %v1759 = vpop.f32.mrb[0].mxu0
      %1760 = vdwg.mxu0
      %v1761 = vadd.f32 %v1670, %v1712
      %v1762 = vadd.f32 %v1673, %v1716
      %v1763 = vmul.f32 %v1761, 0.5
      %v1764 = vmul.f32 %v1762, 0.5
      %v1765 = vtanh.pop %v1763
      %v1766 = vtanh.pop %v1764
      %v1767 = vadd.f32 %v1765, 1.0
      %v1768 = vadd.f32 %v1766, 1.0
      %v1769 = vmul.f32 %v1767, 0.5
      %v1770 = vmul.f32 %v1768, 0.5
      %v1771 = vadd.f32 %v1671, %v1714
      %v1772 = vadd.f32 %v1674, %v1718
      %v1773 = vmul.f32 %v1771, 0.5
      %v1774 = vmul.f32 %v1772, 0.5
      %v1775 = vtanh.pop %v1773
      %v1776 = vtanh.pop %v1774
      %v1777 = vadd.f32 %v1775, 1.0
      %v1778 = vadd.f32 %v1776, 1.0
      %v1779 = vmul.f32 %v1777, 0.5
      %v1780 = vmul.f32 %v1778, 0.5
      %v1781 = vmul.f32 %v1769, %v1755
      %v1782 = vmul.f32 %v1770, %v1758
      %v1783 = vadd.f32 %v1672, %v1781
      %v1784 = vadd.f32 %v1675, %v1782
      %v1785 = vtanh.pop %v1783
      %v1786 = vtanh.pop %v1784
      %v1787 = vsub.f32 1.0, %v1779
      %v1788 = vsub.f32 1.0, %v1780
      %v1789 = vmul.f32 %v1787, %v1785
      %v1790 = vmul.f32 %v1788, %v1786
      %v1791 = vmul.f32 %v1779, %v1662
      %v1792 = vmul.f32 %v1780, %v1663
      %v1793 = vadd.f32 %v1789, %v1791
      %v1794 = vadd.f32 %v1790, %v1792
      %s1795 = sadd.s32 %s53, 7
      %v1796 = vstv %s1795
      %vm1797 = vcmp.lt.s32.totalorder %v1796, %v455
      %vm1798 = vcmp.lt.s32.totalorder %v1796, %v456
      %v1799 = vsel %vm1797, 1, 0
      %v1800 = vsel %vm1798, 1, 0
      %1801 = vset.pattern.permute.xlu0 0
      %1802 = vperm.xlu0 %1801, %v1799
      %v1803 = vpop.permute.xlu0 %1802
      %1804 = vset.pattern.permute.xlu0 0
      %1805 = vperm.xlu0 %1804, %v1800
      %v1806 = vpop.permute.xlu0 %1805
      %vm1807 = vcmp.eq.s32.totalorder %v1803, 1
      %vm1808 = vcmp.eq.s32.totalorder %v1806, 1
      %v1809 = vsel %vm1807, %v1793, %v1662
      %v1810 = vsel %vm1808, %v1794, %v1663
      %1811 = vst [vmem:[#allocation3] sm:$0xff] %v1809
      %1812 = vst [vmem:[#allocation3 + $0x8] sm:$0xff] %v1810
    $region45: #{tpu_custom_call.1} parent=1 // pred_fallthru
      _
    // Predicated region
    $region46: #{tpu_custom_call.1} parent=1 // pred_check
      %p1813 = pneg %p47
    $region47: #{tpu_custom_call.1} parent=1 // pred_check_branch
      %1815 = sbr.rel (%p1813) target = $region49
    $region48: #{tpu_custom_call.1} parent=1 // pred_region
      %v1816 = vld [vmem:[#allocation3] sm:$0xff]
      %v1817 = vld [vmem:[#allocation3 + $0x8] sm:$0xff]
      %v1818 = vpack.c.bf16 %v1817, %v1816
      %v1819 = vld [vmem:[%s7] sm:$0xf]
      %v1820 = vld [vmem:[%s7 + $0x4] sm:$0xf]
      %v1821 = vld [vmem:[%s7 + $0x8] sm:$0xf]
      %v1822 = vld [vmem:[%s7 + $0xc] sm:$0xf]
      %v1823 = vld [vmem:[%s7 + $0x10] sm:$0xf]
      %v1824 = vld [vmem:[%s7 + $0x14] sm:$0xf]
      %v1825 = vld [vmem:[%s7 + $0x18] sm:$0xf]
      %v1826 = vld [vmem:[%s7 + $0x1c] sm:$0xf]
      %v1827 = vld [vmem:[%s7 + $0x20] sm:$0xf]
      %v1828 = vld [vmem:[%s7 + $0x24] sm:$0xf]
      %v1829 = vld [vmem:[%s7 + $0x28] sm:$0xf]
      %v1830 = vld [vmem:[%s7 + $0x2c] sm:$0xf]
      %v1831 = vld [vmem:[%s7 + $0x30] sm:$0xf]
      %v1832 = vld [vmem:[%s7 + $0x34] sm:$0xf]
      %v1833 = vld [vmem:[%s7 + $0x38] sm:$0xf]
      %v1834 = vld [vmem:[%s7 + $0x3c] sm:$0xf]
      %v1835 = vld [vmem:[%s8] sm:$0x1]
      %v1837 = vlaneseq
      %v1838 = vshrl.u32 %v1837, 7
      %v1839 = vsub.s32 0, %v1838
      %v1840 = vrot.slane %v1835, %v1839
      %v1858 = vunpack.c.l.b16 %v1819
      %v1859 = vunpack.c.l.b16 %v1820
      %v1860 = vunpack.c.l.b16 %v1821
      %v1861 = vunpack.c.l.b16 %v1822
      %v1862 = vunpack.c.l.b16 %v1823
      %v1863 = vunpack.c.l.b16 %v1824
      %v1864 = vunpack.c.l.b16 %v1825
      %v1865 = vunpack.c.l.b16 %v1826
      %v1866 = vunpack.c.l.b16 %v1827
      %v1867 = vunpack.c.l.b16 %v1828
      %v1868 = vunpack.c.l.b16 %v1829
      %v1869 = vunpack.c.l.b16 %v1830
      %v1870 = vunpack.c.l.b16 %v1831
      %v1871 = vunpack.c.l.b16 %v1832
      %v1872 = vunpack.c.l.b16 %v1833
      %v1873 = vunpack.c.l.b16 %v1834
      %v1874 = vpack.c.b16 %v1859, %v1858
      %v1875 = vpack.c.b16 %v1861, %v1860
      %v1876 = vpack.c.b16 %v1863, %v1862
      %v1877 = vpack.c.b16 %v1865, %v1864
      %v1878 = vpack.c.b16 %v1867, %v1866
      %v1879 = vpack.c.b16 %v1869, %v1868
      %v1880 = vpack.c.b16 %v1871, %v1870
      %v1881 = vpack.c.b16 %v1873, %v1872
      %1890 = vmatprep.subr.bf16.mxu0 0
      %1891 = vmatpush1.bf16.msra.mxu0 %v1874
      %1892 = vmatprep.subr.bf16.mxu0 0
      %1893 = vmatpush1.bf16.msra.mxu0 %v1875
      %1894 = vmatprep.subr.bf16.mxu0 0
      %1895 = vmatpush1.bf16.msra.mxu0 %v1876
      %1896 = vmatprep.subr.bf16.mxu0 0
      %1897 = vmatpush1.bf16.msra.mxu0 %v1877
      %1898 = vmatprep.subr.bf16.mxu0 0
      %1899 = vmatpush1.bf16.msra.mxu0 %v1878
      %1900 = vmatprep.subr.bf16.mxu0 0
      %1901 = vmatpush1.bf16.msra.mxu0 %v1879
      %1902 = vmatprep.subr.bf16.mxu0 0
      %1903 = vmatpush1.bf16.msra.mxu0 %v1880
      %1904 = vmatprep.subr.bf16.mxu0 0
      %1905 = vmatpush1.bf16.msra.mxu0 %v1881
      %1906 = vmatprep.subr.bf16.mxu0 0
      %1907 = vmatpush1.bf16.msra.mxu0 0
      %1908 = vmatprep.subr.bf16.mxu0 0
      %1909 = vmatpush1.bf16.msra.mxu0 0
      %1910 = vmatprep.subr.bf16.mxu0 0
      %1911 = vmatpush1.bf16.msra.mxu0 0
      %1912 = vmatprep.subr.bf16.mxu0 0
      %1913 = vmatpush1.bf16.msra.mxu0 0
      %1914 = vmatprep.subr.bf16.mxu0 0
      %1915 = vmatpush1.bf16.msra.mxu0 0
      %1916 = vmatprep.subr.bf16.mxu0 0
      %1917 = vmatpush1.bf16.msra.mxu0 0
      %1918 = vmatprep.subr.bf16.mxu0 0
      %1919 = vmatpush1.bf16.msra.mxu0 0
      %1920 = vmatprep.subr.bf16.mxu0 0
      %1921 = vmatpush1.bf16.msra.mxu0 0
      %1922 = vmatprep.mubr.bf16.mxu0 0
      %1923 = vmatmul.mubr.bf16.gmra.mrb[0].mxu0 %v1818
      %v1924 = vpop.f32.mrb[0].mxu0
      %v1925 = vadd.f32 %v1840, %v1924
      %v1926 = vpop.f32.mrb[0].mxu0
      %v1927 = vpop.f32.mrb[0].mxu0
      %v1928 = vadd.f32 %v1840, %v1927
      %v1929 = vpop.f32.mrb[0].mxu0
      %1930 = vdwg.mxu0
      %1931 = vst [vmem:[#allocation9] sm:$0xff] %v1925
      %1932 = vst [vmem:[#allocation9 + $0x8] sm:$0xff] %v1928
    $region49: #{tpu_custom_call.1} parent=1 // pred_fallthru
      _
    // Predicated region
    $region50: #{tpu_custom_call.1} parent=1 // pred_check
      _
    $region51: #{tpu_custom_call.1} parent=1 // pred_check_branch
      %1934 = sbr.rel (0) target = $region53
    $region52: #{tpu_custom_call.1} parent=1 // pred_region
      %s1936 = ssub.s32 256, 256
      %1937 = vsyncadd [#allocation8], %s1936
      %s1938 = sshll.u32 [#allocation9], 4
      %s1939 = int_to_ptr.vmem [resolvable:$true] %s1938
      %1944 = dma.vmem_to_hbm [thread:$0]  %s1939, 256, %s9, [#allocation8], 128, 128, 8
    $region53: #{tpu_custom_call.1} parent=1 // pred_fallthru
      _
    // Predicated region
    $region54: #{tpu_custom_call.1} parent=1 // pred_check
      _
    $region55: #{tpu_custom_call.1} parent=1 // pred_check_branch
      %1946 = sbr.rel (0) target = $region57
    $region56: #{tpu_custom_call.1} parent=1 // pred_region
      %1947 = dma.done [#allocation8], 256
    $region57: #{tpu_custom_call.1} parent=1 // pred_fallthru
      _
    %1948 = vsyncpa [#allocation7], 1
    %1949 = vsyncpa [#allocation8], 1

</llo_original>
